<compile_context>
chip_gen: v5e
topology: v5e:2x2
jax: 0.10.0
libtpu: 0.0.40
codegen_flags: <defaults>
</compile_context>

<pallas_src>
import jax
import jax.numpy as jnp
from jax.experimental import pallas as pl
from jax.experimental.pallas import tpu as pltpu

_K = 7   # kernel_size
_P = 3   # padding (kernel_size == 7)


def _spatial_attention_kernel(x_ref, w_ref, o_ref):
    """x_ref: (1, C, H, W) VMEM; w_ref: (2*K*K,) f32 SMEM; o_ref: (1, 1, H, W) VMEM."""
    _, C, H, W = x_ref.shape
    f32 = jnp.float32

    # ---- channel mean / max, unrolled over (small) C: pure VPU ----------------
    x0 = x_ref[0, 0].astype(f32)
    s, m = x0, x0
    for c in range(1, C):
        xc = x_ref[0, c].astype(f32)
        s = s + xc
        m = jnp.maximum(m, xc)
    avg = s * (1.0 / C)
    planes = (avg, m)                    # matches torch.cat([avg_out, max_out], dim=1)

    # ---- 7x7 zero-padded stencil as matmuls -----------------------------------
    # Row-shift selectors A_dy (H,H): (A_dy @ p)[i,:] = p[i+dy,:], zero outside.
    ii = jax.lax.broadcasted_iota(jnp.int32, (H, H), 0)
    kk = jax.lax.broadcasted_iota(jnp.int32, (H, H), 1)
    shift_mats = [jnp.where(kk == ii + dy, 1.0, 0.0) for dy in range(-_P, _P + 1)]

    # Column band masks: band_masks[kx][m, j] == (m - j == kx - P).
    mm = jax.lax.broadcasted_iota(jnp.int32, (W, W), 0)
    jj = jax.lax.broadcasted_iota(jnp.int32, (W, W), 1)
    band_masks = [(mm - jj) == dx for dx in range(-_P, _P + 1)]

    def band_matrix(c, ky):
        # B[m, j] = w[c, ky, m - j + P] inside the +-P band, else 0, so that
        # (p @ B)[i, j] = sum_kx w[c, ky, kx] * p[i, j + kx - P]  (zero padded).
        b = jnp.zeros((W, W), f32)
        for kx in range(_K):
            wv = w_ref[(c * _K + ky) * _K + kx]          # scalar from SMEM
            b = b + jnp.where(band_masks[kx], wv, 0.0)
        return b

    acc = jnp.zeros((H, W), f32)
    for ky in range(_K):                                 # vertical taps
        inner = jnp.zeros((H, W), f32)
        for c, p in enumerate(planes):                   # avg, max channels
            inner = inner + jnp.dot(p, band_matrix(c, ky),
                                    preferred_element_type=f32)
        acc = acc + jnp.dot(shift_mats[ky], inner, preferred_element_type=f32)

    # ---- fused sigmoid epilogue (exp on the EUP slot) --------------------------
    o_ref[0, 0] = (1.0 / (1.0 + jnp.exp(-acc))).astype(o_ref.dtype)


def spatial_attention(x, weight):
    """CBAM SpatialAttention forward.

    x:      (N, C, H, W)  activations (NCHW, PyTorch convention)
    weight: (1, 2, 7, 7)  conv1 weight (bias=False)
    returns (N, 1, H, W)  sigmoid attention map
    """
    N, C, H, W = x.shape
    assert weight.shape == (1, 2, _K, _K)
    w_flat = weight.astype(jnp.float32).reshape(-1)      # (98,) -> SMEM scalars

    # NOTE: for very large C*H*W a 3-row-halo H tiling (and a raised
    # vmem_limit_bytes) would replace the one-image-per-step blocking below.
    return pl.pallas_call(
        _spatial_attention_kernel,
        out_shape=jax.ShapeDtypeStruct((N, 1, H, W), x.dtype),
        grid=(N,),
        in_specs=[
            pl.BlockSpec((1, C, H, W), lambda n: (n, 0, 0, 0)),
            pl.BlockSpec(memory_space=pltpu.MemorySpace.SMEM),
        ],
        out_specs=pl.BlockSpec((1, 1, H, W), lambda n: (n, 0, 0, 0)),
        compiler_params=pltpu.CompilerParams(
            dimension_semantics=("parallel",)),
    )(x, w_flat)


if __name__ == "__main__":
    key = jax.random.PRNGKey(0)
    kx, kw = jax.random.split(key, 2)

    N, C, H, W = 2, 4, 16, 16
    x = jax.random.normal(kx, (N, C, H, W), dtype=jnp.float32)

    # Conv2d(2, 1, 7, padding=3, bias=False) default init: U(-b, b), b = 1/sqrt(fan_in)
    fan_in = 2 * _K * _K
    bound = 1.0 / (fan_in ** 0.5)
    weight = jax.random.uniform(kw, (1, 2, _K, _K), dtype=jnp.float32,
                                minval=-bound, maxval=bound)

    out = jax.block_until_ready(spatial_attention(x, weight))

    # Pure-JAX reference of the module's forward.
    avg = jnp.mean(x, axis=1, keepdims=True)
    mx = jnp.max(x, axis=1, keepdims=True)
    cat = jnp.concatenate([avg, mx], axis=1)                       # (N, 2, H, W)
    conv = jax.lax.conv_general_dilated(
        cat, weight, window_strides=(1, 1), padding=((_P, _P), (_P, _P)),
        dimension_numbers=("NCHW", "OIHW", "NCHW"))
    ref = jax.nn.sigmoid(conv)

    assert out.shape == (N, 1, H, W)
    err = float(jnp.max(jnp.abs(out - ref)))
    assert jnp.allclose(out, ref, atol=1e-5, rtol=1e-5), err

    print("KERNEL_OK")
</pallas_src>

<mosaic_0001>
module attributes {stable_mosaic.version = 11 : i64} {
  func.func @_spatial_attention_kernel(%arg0: i32, %arg1: memref<1x4x16x16xf32, #tpu.memory_space<vmem>>, %arg2: memref<98xf32, #tpu.memory_space<smem>>, %arg3: memref<1x1x16x16xf32, #tpu.memory_space<vmem>>) attributes {dimension_semantics = [#tpu.dimension_semantics<parallel>], iteration_bounds = array<i64: 2>, scalar_prefetch = 0 : i64, scratch_operands = 0 : i64, tpu.core_type = #tpu.core_type<tc>, window_params = [{transform_indices = @transform_0, window_bounds = array<i64: 1, 4, 16, 16>}, {transform_indices = @transform_1, window_bounds = array<i64: 98>}, {transform_indices = @transform_2, window_bounds = array<i64: 1, 1, 16, 16>}]} {
    %c0 = arith.constant 0 : index
    %c0_0 = arith.constant 0 : index
    %c0_1 = arith.constant 0 : index
    %c0_2 = arith.constant 0 : index
    %0 = vector.load %arg1[%c0, %c0_0, %c0_1, %c0_2] : memref<1x4x16x16xf32, #tpu.memory_space<vmem>>, vector<1x1x16x16xf32>
    %1 = vector.shape_cast %0 : vector<1x1x16x16xf32> to vector<16x16xf32>
    %c0_3 = arith.constant 0 : index
    %c1 = arith.constant 1 : index
    %c0_4 = arith.constant 0 : index
    %c0_5 = arith.constant 0 : index
    %2 = vector.load %arg1[%c0_3, %c1, %c0_4, %c0_5] : memref<1x4x16x16xf32, #tpu.memory_space<vmem>>, vector<1x1x16x16xf32>
    %3 = vector.shape_cast %2 : vector<1x1x16x16xf32> to vector<16x16xf32>
    %4 = arith.addf %1, %3 : vector<16x16xf32>
    %5 = arith.maximumf %1, %3 : vector<16x16xf32>
    %c0_6 = arith.constant 0 : index
    %c2 = arith.constant 2 : index
    %c0_7 = arith.constant 0 : index
    %c0_8 = arith.constant 0 : index
    %6 = vector.load %arg1[%c0_6, %c2, %c0_7, %c0_8] : memref<1x4x16x16xf32, #tpu.memory_space<vmem>>, vector<1x1x16x16xf32>
    %7 = vector.shape_cast %6 : vector<1x1x16x16xf32> to vector<16x16xf32>
    %8 = arith.addf %4, %7 : vector<16x16xf32>
    %9 = arith.maximumf %5, %7 : vector<16x16xf32>
    %c0_9 = arith.constant 0 : index
    %c3 = arith.constant 3 : index
    %c0_10 = arith.constant 0 : index
    %c0_11 = arith.constant 0 : index
    %10 = vector.load %arg1[%c0_9, %c3, %c0_10, %c0_11] : memref<1x4x16x16xf32, #tpu.memory_space<vmem>>, vector<1x1x16x16xf32>
    %11 = vector.shape_cast %10 : vector<1x1x16x16xf32> to vector<16x16xf32>
    %12 = arith.addf %8, %11 : vector<16x16xf32>
    %13 = arith.maximumf %9, %11 : vector<16x16xf32>
    %cst = arith.constant 2.500000e-01 : f32
    %14 = vector.broadcast %cst : f32 to vector<16x16xf32>
    %15 = arith.mulf %12, %14 : vector<16x16xf32>
    %16 = tpu.iota {dimensions = array<i32: 0>} : vector<16x16xi32>
    %17 = tpu.iota {dimensions = array<i32: 1>} : vector<16x16xi32>
    %c-3_i32 = arith.constant -3 : i32
    %18 = vector.broadcast %c-3_i32 : i32 to vector<16x16xi32>
    %19 = arith.addi %16, %18 : vector<16x16xi32>
    %20 = arith.cmpi eq, %17, %19 : vector<16x16xi32>
    %cst_12 = arith.constant 1.000000e+00 : f32
    %cst_13 = arith.constant 0.000000e+00 : f32
    %21 = vector.broadcast %cst_12 : f32 to vector<16x16xf32>
    %22 = vector.broadcast %cst_13 : f32 to vector<16x16xf32>
    %23 = arith.select %20, %21, %22 : vector<16x16xi1>, vector<16x16xf32>
    %c-2_i32 = arith.constant -2 : i32
    %24 = vector.broadcast %c-2_i32 : i32 to vector<16x16xi32>
    %25 = arith.addi %16, %24 : vector<16x16xi32>
    %26 = arith.cmpi eq, %17, %25 : vector<16x16xi32>
    %cst_14 = arith.constant 1.000000e+00 : f32
    %cst_15 = arith.constant 0.000000e+00 : f32
    %27 = vector.broadcast %cst_14 : f32 to vector<16x16xf32>
    %28 = vector.broadcast %cst_15 : f32 to vector<16x16xf32>
    %29 = arith.select %26, %27, %28 : vector<16x16xi1>, vector<16x16xf32>
    %c-1_i32 = arith.constant -1 : i32
    %30 = vector.broadcast %c-1_i32 : i32 to vector<16x16xi32>
    %31 = arith.addi %16, %30 : vector<16x16xi32>
    %32 = arith.cmpi eq, %17, %31 : vector<16x16xi32>
    %cst_16 = arith.constant 1.000000e+00 : f32
    %cst_17 = arith.constant 0.000000e+00 : f32
    %33 = vector.broadcast %cst_16 : f32 to vector<16x16xf32>
    %34 = vector.broadcast %cst_17 : f32 to vector<16x16xf32>
    %35 = arith.select %32, %33, %34 : vector<16x16xi1>, vector<16x16xf32>
    %c0_i32 = arith.constant 0 : i32
    %36 = vector.broadcast %c0_i32 : i32 to vector<16x16xi32>
    %37 = arith.addi %16, %36 : vector<16x16xi32>
    %38 = arith.cmpi eq, %17, %37 : vector<16x16xi32>
    %cst_18 = arith.constant 1.000000e+00 : f32
    %cst_19 = arith.constant 0.000000e+00 : f32
    %39 = vector.broadcast %cst_18 : f32 to vector<16x16xf32>
    %40 = vector.broadcast %cst_19 : f32 to vector<16x16xf32>
    %41 = arith.select %38, %39, %40 : vector<16x16xi1>, vector<16x16xf32>
    %c1_i32 = arith.constant 1 : i32
    %42 = vector.broadcast %c1_i32 : i32 to vector<16x16xi32>
    %43 = arith.addi %16, %42 : vector<16x16xi32>
    %44 = arith.cmpi eq, %17, %43 : vector<16x16xi32>
    %cst_20 = arith.constant 1.000000e+00 : f32
    %cst_21 = arith.constant 0.000000e+00 : f32
    %45 = vector.broadcast %cst_20 : f32 to vector<16x16xf32>
    %46 = vector.broadcast %cst_21 : f32 to vector<16x16xf32>
    %47 = arith.select %44, %45, %46 : vector<16x16xi1>, vector<16x16xf32>
    %c2_i32 = arith.constant 2 : i32
    %48 = vector.broadcast %c2_i32 : i32 to vector<16x16xi32>
    %49 = arith.addi %16, %48 : vector<16x16xi32>
    %50 = arith.cmpi eq, %17, %49 : vector<16x16xi32>
    %cst_22 = arith.constant 1.000000e+00 : f32
    %cst_23 = arith.constant 0.000000e+00 : f32
    %51 = vector.broadcast %cst_22 : f32 to vector<16x16xf32>
    %52 = vector.broadcast %cst_23 : f32 to vector<16x16xf32>
    %53 = arith.select %50, %51, %52 : vector<16x16xi1>, vector<16x16xf32>
    %c3_i32 = arith.constant 3 : i32
    %54 = vector.broadcast %c3_i32 : i32 to vector<16x16xi32>
    %55 = arith.addi %16, %54 : vector<16x16xi32>
    %56 = arith.cmpi eq, %17, %55 : vector<16x16xi32>
    %cst_24 = arith.constant 1.000000e+00 : f32
    %cst_25 = arith.constant 0.000000e+00 : f32
    %57 = vector.broadcast %cst_24 : f32 to vector<16x16xf32>
    %58 = vector.broadcast %cst_25 : f32 to vector<16x16xf32>
    %59 = arith.select %56, %57, %58 : vector<16x16xi1>, vector<16x16xf32>
    %60 = tpu.iota {dimensions = array<i32: 0>} : vector<16x16xi32>
    %61 = tpu.iota {dimensions = array<i32: 1>} : vector<16x16xi32>
    %62 = arith.subi %60, %61 : vector<16x16xi32>
    %c-3_i32_26 = arith.constant -3 : i32
    %63 = vector.broadcast %c-3_i32_26 : i32 to vector<16x16xi32>
    %64 = arith.cmpi eq, %62, %63 : vector<16x16xi32>
    %65 = arith.subi %60, %61 : vector<16x16xi32>
    %c-2_i32_27 = arith.constant -2 : i32
    %66 = vector.broadcast %c-2_i32_27 : i32 to vector<16x16xi32>
    %67 = arith.cmpi eq, %65, %66 : vector<16x16xi32>
    %68 = arith.subi %60, %61 : vector<16x16xi32>
    %c-1_i32_28 = arith.constant -1 : i32
    %69 = vector.broadcast %c-1_i32_28 : i32 to vector<16x16xi32>
    %70 = arith.cmpi eq, %68, %69 : vector<16x16xi32>
    %71 = arith.subi %60, %61 : vector<16x16xi32>
    %c0_i32_29 = arith.constant 0 : i32
    %72 = vector.broadcast %c0_i32_29 : i32 to vector<16x16xi32>
    %73 = arith.cmpi eq, %71, %72 : vector<16x16xi32>
    %74 = arith.subi %60, %61 : vector<16x16xi32>
    %c1_i32_30 = arith.constant 1 : i32
    %75 = vector.broadcast %c1_i32_30 : i32 to vector<16x16xi32>
    %76 = arith.cmpi eq, %74, %75 : vector<16x16xi32>
    %77 = arith.subi %60, %61 : vector<16x16xi32>
    %c2_i32_31 = arith.constant 2 : i32
    %78 = vector.broadcast %c2_i32_31 : i32 to vector<16x16xi32>
    %79 = arith.cmpi eq, %77, %78 : vector<16x16xi32>
    %80 = arith.subi %60, %61 : vector<16x16xi32>
    %c3_i32_32 = arith.constant 3 : i32
    %81 = vector.broadcast %c3_i32_32 : i32 to vector<16x16xi32>
    %82 = arith.cmpi eq, %80, %81 : vector<16x16xi32>
    %cst_33 = arith.constant 0.000000e+00 : f32
    %83 = vector.broadcast %cst_33 : f32 to vector<16x16xf32>
    %cst_34 = arith.constant 0.000000e+00 : f32
    %84 = vector.broadcast %cst_34 : f32 to vector<16x16xf32>
    %cst_35 = arith.constant 0.000000e+00 : f32
    %85 = vector.broadcast %cst_35 : f32 to vector<16x16xf32>
    %c0_36 = arith.constant 0 : index
    %86 = memref.load %arg2[%c0_36] : memref<98xf32, #tpu.memory_space<smem>>
    %cst_37 = arith.constant 0.000000e+00 : f32
    %87 = vector.broadcast %86 : f32 to vector<16x16xf32>
    %88 = vector.broadcast %cst_37 : f32 to vector<16x16xf32>
    %89 = arith.select %64, %87, %88 : vector<16x16xi1>, vector<16x16xf32>
    %90 = arith.addf %85, %89 : vector<16x16xf32>
    %c1_38 = arith.constant 1 : index
    %91 = memref.load %arg2[%c1_38] : memref<98xf32, #tpu.memory_space<smem>>
    %cst_39 = arith.constant 0.000000e+00 : f32
    %92 = vector.broadcast %91 : f32 to vector<16x16xf32>
    %93 = vector.broadcast %cst_39 : f32 to vector<16x16xf32>
    %94 = arith.select %67, %92, %93 : vector<16x16xi1>, vector<16x16xf32>
    %95 = arith.addf %90, %94 : vector<16x16xf32>
    %c2_40 = arith.constant 2 : index
    %96 = memref.load %arg2[%c2_40] : memref<98xf32, #tpu.memory_space<smem>>
    %cst_41 = arith.constant 0.000000e+00 : f32
    %97 = vector.broadcast %96 : f32 to vector<16x16xf32>
    %98 = vector.broadcast %cst_41 : f32 to vector<16x16xf32>
    %99 = arith.select %70, %97, %98 : vector<16x16xi1>, vector<16x16xf32>
    %100 = arith.addf %95, %99 : vector<16x16xf32>
    %c3_42 = arith.constant 3 : index
    %101 = memref.load %arg2[%c3_42] : memref<98xf32, #tpu.memory_space<smem>>
    %cst_43 = arith.constant 0.000000e+00 : f32
    %102 = vector.broadcast %101 : f32 to vector<16x16xf32>
    %103 = vector.broadcast %cst_43 : f32 to vector<16x16xf32>
    %104 = arith.select %73, %102, %103 : vector<16x16xi1>, vector<16x16xf32>
    %105 = arith.addf %100, %104 : vector<16x16xf32>
    %c4 = arith.constant 4 : index
    %106 = memref.load %arg2[%c4] : memref<98xf32, #tpu.memory_space<smem>>
    %cst_44 = arith.constant 0.000000e+00 : f32
    %107 = vector.broadcast %106 : f32 to vector<16x16xf32>
    %108 = vector.broadcast %cst_44 : f32 to vector<16x16xf32>
    %109 = arith.select %76, %107, %108 : vector<16x16xi1>, vector<16x16xf32>
    %110 = arith.addf %105, %109 : vector<16x16xf32>
    %c5 = arith.constant 5 : index
    %111 = memref.load %arg2[%c5] : memref<98xf32, #tpu.memory_space<smem>>
    %cst_45 = arith.constant 0.000000e+00 : f32
    %112 = vector.broadcast %111 : f32 to vector<16x16xf32>
    %113 = vector.broadcast %cst_45 : f32 to vector<16x16xf32>
    %114 = arith.select %79, %112, %113 : vector<16x16xi1>, vector<16x16xf32>
    %115 = arith.addf %110, %114 : vector<16x16xf32>
    %c6 = arith.constant 6 : index
    %116 = memref.load %arg2[%c6] : memref<98xf32, #tpu.memory_space<smem>>
    %cst_46 = arith.constant 0.000000e+00 : f32
    %117 = vector.broadcast %116 : f32 to vector<16x16xf32>
    %118 = vector.broadcast %cst_46 : f32 to vector<16x16xf32>
    %119 = arith.select %82, %117, %118 : vector<16x16xi1>, vector<16x16xf32>
    %120 = arith.addf %115, %119 : vector<16x16xf32>
    %cst_47 = arith.constant dense<0.000000e+00> : vector<16x16xf32>
    %121 = tpu.matmul %15, %120, %cst_47 {dimension_numbers = #tpu.dot_dimension_numbers<[1], [0], [0], [1], [0, 0, 1, 1], [], []>} : vector<16x16xf32>, vector<16x16xf32>, vector<16x16xf32> -> vector<16x16xf32>
    %122 = arith.addf %84, %121 : vector<16x16xf32>
    %cst_48 = arith.constant 0.000000e+00 : f32
    %123 = vector.broadcast %cst_48 : f32 to vector<16x16xf32>
    %c49 = arith.constant 49 : index
    %124 = memref.load %arg2[%c49] : memref<98xf32, #tpu.memory_space<smem>>
    %cst_49 = arith.constant 0.000000e+00 : f32
    %125 = vector.broadcast %124 : f32 to vector<16x16xf32>
    %126 = vector.broadcast %cst_49 : f32 to vector<16x16xf32>
    %127 = arith.select %64, %125, %126 : vector<16x16xi1>, vector<16x16xf32>
    %128 = arith.addf %123, %127 : vector<16x16xf32>
    %c50 = arith.constant 50 : index
    %129 = memref.load %arg2[%c50] : memref<98xf32, #tpu.memory_space<smem>>
    %cst_50 = arith.constant 0.000000e+00 : f32
    %130 = vector.broadcast %129 : f32 to vector<16x16xf32>
    %131 = vector.broadcast %cst_50 : f32 to vector<16x16xf32>
    %132 = arith.select %67, %130, %131 : vector<16x16xi1>, vector<16x16xf32>
    %133 = arith.addf %128, %132 : vector<16x16xf32>
    %c51 = arith.constant 51 : index
    %134 = memref.load %arg2[%c51] : memref<98xf32, #tpu.memory_space<smem>>
    %cst_51 = arith.constant 0.000000e+00 : f32
    %135 = vector.broadcast %134 : f32 to vector<16x16xf32>
    %136 = vector.broadcast %cst_51 : f32 to vector<16x16xf32>
    %137 = arith.select %70, %135, %136 : vector<16x16xi1>, vector<16x16xf32>
    %138 = arith.addf %133, %137 : vector<16x16xf32>
    %c52 = arith.constant 52 : index
    %139 = memref.load %arg2[%c52] : memref<98xf32, #tpu.memory_space<smem>>
    %cst_52 = arith.constant 0.000000e+00 : f32
    %140 = vector.broadcast %139 : f32 to vector<16x16xf32>
    %141 = vector.broadcast %cst_52 : f32 to vector<16x16xf32>
    %142 = arith.select %73, %140, %141 : vector<16x16xi1>, vector<16x16xf32>
    %143 = arith.addf %138, %142 : vector<16x16xf32>
    %c53 = arith.constant 53 : index
    %144 = memref.load %arg2[%c53] : memref<98xf32, #tpu.memory_space<smem>>
    %cst_53 = arith.constant 0.000000e+00 : f32
    %145 = vector.broadcast %144 : f32 to vector<16x16xf32>
    %146 = vector.broadcast %cst_53 : f32 to vector<16x16xf32>
    %147 = arith.select %76, %145, %146 : vector<16x16xi1>, vector<16x16xf32>
    %148 = arith.addf %143, %147 : vector<16x16xf32>
    %c54 = arith.constant 54 : index
    %149 = memref.load %arg2[%c54] : memref<98xf32, #tpu.memory_space<smem>>
    %cst_54 = arith.constant 0.000000e+00 : f32
    %150 = vector.broadcast %149 : f32 to vector<16x16xf32>
    %151 = vector.broadcast %cst_54 : f32 to vector<16x16xf32>
    %152 = arith.select %79, %150, %151 : vector<16x16xi1>, vector<16x16xf32>
    %153 = arith.addf %148, %152 : vector<16x16xf32>
    %c55 = arith.constant 55 : index
    %154 = memref.load %arg2[%c55] : memref<98xf32, #tpu.memory_space<smem>>
    %cst_55 = arith.constant 0.000000e+00 : f32
    %155 = vector.broadcast %154 : f32 to vector<16x16xf32>
    %156 = vector.broadcast %cst_55 : f32 to vector<16x16xf32>
    %157 = arith.select %82, %155, %156 : vector<16x16xi1>, vector<16x16xf32>
    %158 = arith.addf %153, %157 : vector<16x16xf32>
    %cst_56 = arith.constant dense<0.000000e+00> : vector<16x16xf32>
    %159 = tpu.matmul %13, %158, %cst_56 {dimension_numbers = #tpu.dot_dimension_numbers<[1], [0], [0], [1], [0, 0, 1, 1], [], []>} : vector<16x16xf32>, vector<16x16xf32>, vector<16x16xf32> -> vector<16x16xf32>
    %160 = arith.addf %122, %159 : vector<16x16xf32>
    %cst_57 = arith.constant dense<0.000000e+00> : vector<16x16xf32>
    %161 = tpu.matmul %23, %160, %cst_57 {dimension_numbers = #tpu.dot_dimension_numbers<[1], [0], [0], [1], [0, 0, 1, 1], [], []>} : vector<16x16xf32>, vector<16x16xf32>, vector<16x16xf32> -> vector<16x16xf32>
    %162 = arith.addf %83, %161 : vector<16x16xf32>
    %cst_58 = arith.constant 0.000000e+00 : f32
    %163 = vector.broadcast %cst_58 : f32 to vector<16x16xf32>
    %cst_59 = arith.constant 0.000000e+00 : f32
    %164 = vector.broadcast %cst_59 : f32 to vector<16x16xf32>
    %c7 = arith.constant 7 : index
    %165 = memref.load %arg2[%c7] : memref<98xf32, #tpu.memory_space<smem>>
    %cst_60 = arith.constant 0.000000e+00 : f32
    %166 = vector.broadcast %165 : f32 to vector<16x16xf32>
    %167 = vector.broadcast %cst_60 : f32 to vector<16x16xf32>
    %168 = arith.select %64, %166, %167 : vector<16x16xi1>, vector<16x16xf32>
    %169 = arith.addf %164, %168 : vector<16x16xf32>
    %c8 = arith.constant 8 : index
    %170 = memref.load %arg2[%c8] : memref<98xf32, #tpu.memory_space<smem>>
    %cst_61 = arith.constant 0.000000e+00 : f32
    %171 = vector.broadcast %170 : f32 to vector<16x16xf32>
    %172 = vector.broadcast %cst_61 : f32 to vector<16x16xf32>
    %173 = arith.select %67, %171, %172 : vector<16x16xi1>, vector<16x16xf32>
    %174 = arith.addf %169, %173 : vector<16x16xf32>
    %c9 = arith.constant 9 : index
    %175 = memref.load %arg2[%c9] : memref<98xf32, #tpu.memory_space<smem>>
    %cst_62 = arith.constant 0.000000e+00 : f32
    %176 = vector.broadcast %175 : f32 to vector<16x16xf32>
    %177 = vector.broadcast %cst_62 : f32 to vector<16x16xf32>
    %178 = arith.select %70, %176, %177 : vector<16x16xi1>, vector<16x16xf32>
    %179 = arith.addf %174, %178 : vector<16x16xf32>
    %c10 = arith.constant 10 : index
    %180 = memref.load %arg2[%c10] : memref<98xf32, #tpu.memory_space<smem>>
    %cst_63 = arith.constant 0.000000e+00 : f32
    %181 = vector.broadcast %180 : f32 to vector<16x16xf32>
    %182 = vector.broadcast %cst_63 : f32 to vector<16x16xf32>
    %183 = arith.select %73, %181, %182 : vector<16x16xi1>, vector<16x16xf32>
    %184 = arith.addf %179, %183 : vector<16x16xf32>
    %c11 = arith.constant 11 : index
    %185 = memref.load %arg2[%c11] : memref<98xf32, #tpu.memory_space<smem>>
    %cst_64 = arith.constant 0.000000e+00 : f32
    %186 = vector.broadcast %185 : f32 to vector<16x16xf32>
    %187 = vector.broadcast %cst_64 : f32 to vector<16x16xf32>
    %188 = arith.select %76, %186, %187 : vector<16x16xi1>, vector<16x16xf32>
    %189 = arith.addf %184, %188 : vector<16x16xf32>
    %c12 = arith.constant 12 : index
    %190 = memref.load %arg2[%c12] : memref<98xf32, #tpu.memory_space<smem>>
    %cst_65 = arith.constant 0.000000e+00 : f32
    %191 = vector.broadcast %190 : f32 to vector<16x16xf32>
    %192 = vector.broadcast %cst_65 : f32 to vector<16x16xf32>
    %193 = arith.select %79, %191, %192 : vector<16x16xi1>, vector<16x16xf32>
    %194 = arith.addf %189, %193 : vector<16x16xf32>
    %c13 = arith.constant 13 : index
    %195 = memref.load %arg2[%c13] : memref<98xf32, #tpu.memory_space<smem>>
    %cst_66 = arith.constant 0.000000e+00 : f32
    %196 = vector.broadcast %195 : f32 to vector<16x16xf32>
    %197 = vector.broadcast %cst_66 : f32 to vector<16x16xf32>
    %198 = arith.select %82, %196, %197 : vector<16x16xi1>, vector<16x16xf32>
    %199 = arith.addf %194, %198 : vector<16x16xf32>
    %cst_67 = arith.constant dense<0.000000e+00> : vector<16x16xf32>
    %200 = tpu.matmul %15, %199, %cst_67 {dimension_numbers = #tpu.dot_dimension_numbers<[1], [0], [0], [1], [0, 0, 1, 1], [], []>} : vector<16x16xf32>, vector<16x16xf32>, vector<16x16xf32> -> vector<16x16xf32>
    %201 = arith.addf %163, %200 : vector<16x16xf32>
    %cst_68 = arith.constant 0.000000e+00 : f32
    %202 = vector.broadcast %cst_68 : f32 to vector<16x16xf32>
    %c56 = arith.constant 56 : index
    %203 = memref.load %arg2[%c56] : memref<98xf32, #tpu.memory_space<smem>>
    %cst_69 = arith.constant 0.000000e+00 : f32
    %204 = vector.broadcast %203 : f32 to vector<16x16xf32>
    %205 = vector.broadcast %cst_69 : f32 to vector<16x16xf32>
    %206 = arith.select %64, %204, %205 : vector<16x16xi1>, vector<16x16xf32>
    %207 = arith.addf %202, %206 : vector<16x16xf32>
    %c57 = arith.constant 57 : index
    %208 = memref.load %arg2[%c57] : memref<98xf32, #tpu.memory_space<smem>>
    %cst_70 = arith.constant 0.000000e+00 : f32
    %209 = vector.broadcast %208 : f32 to vector<16x16xf32>
    %210 = vector.broadcast %cst_70 : f32 to vector<16x16xf32>
    %211 = arith.select %67, %209, %210 : vector<16x16xi1>, vector<16x16xf32>
    %212 = arith.addf %207, %211 : vector<16x16xf32>
    %c58 = arith.constant 58 : index
    %213 = memref.load %arg2[%c58] : memref<98xf32, #tpu.memory_space<smem>>
    %cst_71 = arith.constant 0.000000e+00 : f32
    %214 = vector.broadcast %213 : f32 to vector<16x16xf32>
    %215 = vector.broadcast %cst_71 : f32 to vector<16x16xf32>
    %216 = arith.select %70, %214, %215 : vector<16x16xi1>, vector<16x16xf32>
    %217 = arith.addf %212, %216 : vector<16x16xf32>
    %c59 = arith.constant 59 : index
    %218 = memref.load %arg2[%c59] : memref<98xf32, #tpu.memory_space<smem>>
    %cst_72 = arith.constant 0.000000e+00 : f32
    %219 = vector.broadcast %218 : f32 to vector<16x16xf32>
    %220 = vector.broadcast %cst_72 : f32 to vector<16x16xf32>
    %221 = arith.select %73, %219, %220 : vector<16x16xi1>, vector<16x16xf32>
    %222 = arith.addf %217, %221 : vector<16x16xf32>
    %c60 = arith.constant 60 : index
    %223 = memref.load %arg2[%c60] : memref<98xf32, #tpu.memory_space<smem>>
    %cst_73 = arith.constant 0.000000e+00 : f32
    %224 = vector.broadcast %223 : f32 to vector<16x16xf32>
    %225 = vector.broadcast %cst_73 : f32 to vector<16x16xf32>
    %226 = arith.select %76, %224, %225 : vector<16x16xi1>, vector<16x16xf32>
    %227 = arith.addf %222, %226 : vector<16x16xf32>
    %c61 = arith.constant 61 : index
    %228 = memref.load %arg2[%c61] : memref<98xf32, #tpu.memory_space<smem>>
    %cst_74 = arith.constant 0.000000e+00 : f32
    %229 = vector.broadcast %228 : f32 to vector<16x16xf32>
    %230 = vector.broadcast %cst_74 : f32 to vector<16x16xf32>
    %231 = arith.select %79, %229, %230 : vector<16x16xi1>, vector<16x16xf32>
    %232 = arith.addf %227, %231 : vector<16x16xf32>
    %c62 = arith.constant 62 : index
    %233 = memref.load %arg2[%c62] : memref<98xf32, #tpu.memory_space<smem>>
    %cst_75 = arith.constant 0.000000e+00 : f32
    %234 = vector.broadcast %233 : f32 to vector<16x16xf32>
    %235 = vector.broadcast %cst_75 : f32 to vector<16x16xf32>
    %236 = arith.select %82, %234, %235 : vector<16x16xi1>, vector<16x16xf32>
    %237 = arith.addf %232, %236 : vector<16x16xf32>
    %cst_76 = arith.constant dense<0.000000e+00> : vector<16x16xf32>
    %238 = tpu.matmul %13, %237, %cst_76 {dimension_numbers = #tpu.dot_dimension_numbers<[1], [0], [0], [1], [0, 0, 1, 1], [], []>} : vector<16x16xf32>, vector<16x16xf32>, vector<16x16xf32> -> vector<16x16xf32>
    %239 = arith.addf %201, %238 : vector<16x16xf32>
    %cst_77 = arith.constant dense<0.000000e+00> : vector<16x16xf32>
    %240 = tpu.matmul %29, %239, %cst_77 {dimension_numbers = #tpu.dot_dimension_numbers<[1], [0], [0], [1], [0, 0, 1, 1], [], []>} : vector<16x16xf32>, vector<16x16xf32>, vector<16x16xf32> -> vector<16x16xf32>
    %241 = arith.addf %162, %240 : vector<16x16xf32>
    %cst_78 = arith.constant 0.000000e+00 : f32
    %242 = vector.broadcast %cst_78 : f32 to vector<16x16xf32>
    %cst_79 = arith.constant 0.000000e+00 : f32
    %243 = vector.broadcast %cst_79 : f32 to vector<16x16xf32>
    %c14 = arith.constant 14 : index
    %244 = memref.load %arg2[%c14] : memref<98xf32, #tpu.memory_space<smem>>
    %cst_80 = arith.constant 0.000000e+00 : f32
    %245 = vector.broadcast %244 : f32 to vector<16x16xf32>
    %246 = vector.broadcast %cst_80 : f32 to vector<16x16xf32>
    %247 = arith.select %64, %245, %246 : vector<16x16xi1>, vector<16x16xf32>
    %248 = arith.addf %243, %247 : vector<16x16xf32>
    %c15 = arith.constant 15 : index
    %249 = memref.load %arg2[%c15] : memref<98xf32, #tpu.memory_space<smem>>
    %cst_81 = arith.constant 0.000000e+00 : f32
    %250 = vector.broadcast %249 : f32 to vector<16x16xf32>
    %251 = vector.broadcast %cst_81 : f32 to vector<16x16xf32>
    %252 = arith.select %67, %250, %251 : vector<16x16xi1>, vector<16x16xf32>
    %253 = arith.addf %248, %252 : vector<16x16xf32>
    %c16 = arith.constant 16 : index
    %254 = memref.load %arg2[%c16] : memref<98xf32, #tpu.memory_space<smem>>
    %cst_82 = arith.constant 0.000000e+00 : f32
    %255 = vector.broadcast %254 : f32 to vector<16x16xf32>
    %256 = vector.broadcast %cst_82 : f32 to vector<16x16xf32>
    %257 = arith.select %70, %255, %256 : vector<16x16xi1>, vector<16x16xf32>
    %258 = arith.addf %253, %257 : vector<16x16xf32>
    %c17 = arith.constant 17 : index
    %259 = memref.load %arg2[%c17] : memref<98xf32, #tpu.memory_space<smem>>
    %cst_83 = arith.constant 0.000000e+00 : f32
    %260 = vector.broadcast %259 : f32 to vector<16x16xf32>
    %261 = vector.broadcast %cst_83 : f32 to vector<16x16xf32>
    %262 = arith.select %73, %260, %261 : vector<16x16xi1>, vector<16x16xf32>
    %263 = arith.addf %258, %262 : vector<16x16xf32>
    %c18 = arith.constant 18 : index
    %264 = memref.load %arg2[%c18] : memref<98xf32, #tpu.memory_space<smem>>
    %cst_84 = arith.constant 0.000000e+00 : f32
    %265 = vector.broadcast %264 : f32 to vector<16x16xf32>
    %266 = vector.broadcast %cst_84 : f32 to vector<16x16xf32>
    %267 = arith.select %76, %265, %266 : vector<16x16xi1>, vector<16x16xf32>
    %268 = arith.addf %263, %267 : vector<16x16xf32>
    %c19 = arith.constant 19 : index
    %269 = memref.load %arg2[%c19] : memref<98xf32, #tpu.memory_space<smem>>
    %cst_85 = arith.constant 0.000000e+00 : f32
    %270 = vector.broadcast %269 : f32 to vector<16x16xf32>
    %271 = vector.broadcast %cst_85 : f32 to vector<16x16xf32>
    %272 = arith.select %79, %270, %271 : vector<16x16xi1>, vector<16x16xf32>
    %273 = arith.addf %268, %272 : vector<16x16xf32>
    %c20 = arith.constant 20 : index
    %274 = memref.load %arg2[%c20] : memref<98xf32, #tpu.memory_space<smem>>
    %cst_86 = arith.constant 0.000000e+00 : f32
    %275 = vector.broadcast %274 : f32 to vector<16x16xf32>
    %276 = vector.broadcast %cst_86 : f32 to vector<16x16xf32>
    %277 = arith.select %82, %275, %276 : vector<16x16xi1>, vector<16x16xf32>
    %278 = arith.addf %273, %277 : vector<16x16xf32>
    %cst_87 = arith.constant dense<0.000000e+00> : vector<16x16xf32>
    %279 = tpu.matmul %15, %278, %cst_87 {dimension_numbers = #tpu.dot_dimension_numbers<[1], [0], [0], [1], [0, 0, 1, 1], [], []>} : vector<16x16xf32>, vector<16x16xf32>, vector<16x16xf32> -> vector<16x16xf32>
    %280 = arith.addf %242, %279 : vector<16x16xf32>
    %cst_88 = arith.constant 0.000000e+00 : f32
    %281 = vector.broadcast %cst_88 : f32 to vector<16x16xf32>
    %c63 = arith.constant 63 : index
    %282 = memref.load %arg2[%c63] : memref<98xf32, #tpu.memory_space<smem>>
    %cst_89 = arith.constant 0.000000e+00 : f32
    %283 = vector.broadcast %282 : f32 to vector<16x16xf32>
    %284 = vector.broadcast %cst_89 : f32 to vector<16x16xf32>
    %285 = arith.select %64, %283, %284 : vector<16x16xi1>, vector<16x16xf32>
    %286 = arith.addf %281, %285 : vector<16x16xf32>
    %c64 = arith.constant 64 : index
    %287 = memref.load %arg2[%c64] : memref<98xf32, #tpu.memory_space<smem>>
    %cst_90 = arith.constant 0.000000e+00 : f32
    %288 = vector.broadcast %287 : f32 to vector<16x16xf32>
    %289 = vector.broadcast %cst_90 : f32 to vector<16x16xf32>
    %290 = arith.select %67, %288, %289 : vector<16x16xi1>, vector<16x16xf32>
    %291 = arith.addf %286, %290 : vector<16x16xf32>
    %c65 = arith.constant 65 : index
    %292 = memref.load %arg2[%c65] : memref<98xf32, #tpu.memory_space<smem>>
    %cst_91 = arith.constant 0.000000e+00 : f32
    %293 = vector.broadcast %292 : f32 to vector<16x16xf32>
    %294 = vector.broadcast %cst_91 : f32 to vector<16x16xf32>
    %295 = arith.select %70, %293, %294 : vector<16x16xi1>, vector<16x16xf32>
    %296 = arith.addf %291, %295 : vector<16x16xf32>
    %c66 = arith.constant 66 : index
    %297 = memref.load %arg2[%c66] : memref<98xf32, #tpu.memory_space<smem>>
    %cst_92 = arith.constant 0.000000e+00 : f32
    %298 = vector.broadcast %297 : f32 to vector<16x16xf32>
    %299 = vector.broadcast %cst_92 : f32 to vector<16x16xf32>
    %300 = arith.select %73, %298, %299 : vector<16x16xi1>, vector<16x16xf32>
    %301 = arith.addf %296, %300 : vector<16x16xf32>
    %c67 = arith.constant 67 : index
    %302 = memref.load %arg2[%c67] : memref<98xf32, #tpu.memory_space<smem>>
    %cst_93 = arith.constant 0.000000e+00 : f32
    %303 = vector.broadcast %302 : f32 to vector<16x16xf32>
    %304 = vector.broadcast %cst_93 : f32 to vector<16x16xf32>
    %305 = arith.select %76, %303, %304 : vector<16x16xi1>, vector<16x16xf32>
    %306 = arith.addf %301, %305 : vector<16x16xf32>
    %c68 = arith.constant 68 : index
    %307 = memref.load %arg2[%c68] : memref<98xf32, #tpu.memory_space<smem>>
    %cst_94 = arith.constant 0.000000e+00 : f32
    %308 = vector.broadcast %307 : f32 to vector<16x16xf32>
    %309 = vector.broadcast %cst_94 : f32 to vector<16x16xf32>
    %310 = arith.select %79, %308, %309 : vector<16x16xi1>, vector<16x16xf32>
    %311 = arith.addf %306, %310 : vector<16x16xf32>
    %c69 = arith.constant 69 : index
    %312 = memref.load %arg2[%c69] : memref<98xf32, #tpu.memory_space<smem>>
    %cst_95 = arith.constant 0.000000e+00 : f32
    %313 = vector.broadcast %312 : f32 to vector<16x16xf32>
    %314 = vector.broadcast %cst_95 : f32 to vector<16x16xf32>
    %315 = arith.select %82, %313, %314 : vector<16x16xi1>, vector<16x16xf32>
    %316 = arith.addf %311, %315 : vector<16x16xf32>
    %cst_96 = arith.constant dense<0.000000e+00> : vector<16x16xf32>
    %317 = tpu.matmul %13, %316, %cst_96 {dimension_numbers = #tpu.dot_dimension_numbers<[1], [0], [0], [1], [0, 0, 1, 1], [], []>} : vector<16x16xf32>, vector<16x16xf32>, vector<16x16xf32> -> vector<16x16xf32>
    %318 = arith.addf %280, %317 : vector<16x16xf32>
    %cst_97 = arith.constant dense<0.000000e+00> : vector<16x16xf32>
    %319 = tpu.matmul %35, %318, %cst_97 {dimension_numbers = #tpu.dot_dimension_numbers<[1], [0], [0], [1], [0, 0, 1, 1], [], []>} : vector<16x16xf32>, vector<16x16xf32>, vector<16x16xf32> -> vector<16x16xf32>
    %320 = arith.addf %241, %319 : vector<16x16xf32>
    %cst_98 = arith.constant 0.000000e+00 : f32
    %321 = vector.broadcast %cst_98 : f32 to vector<16x16xf32>
    %cst_99 = arith.constant 0.000000e+00 : f32
    %322 = vector.broadcast %cst_99 : f32 to vector<16x16xf32>
    %c21 = arith.constant 21 : index
    %323 = memref.load %arg2[%c21] : memref<98xf32, #tpu.memory_space<smem>>
    %cst_100 = arith.constant 0.000000e+00 : f32
    %324 = vector.broadcast %323 : f32 to vector<16x16xf32>
    %325 = vector.broadcast %cst_100 : f32 to vector<16x16xf32>
    %326 = arith.select %64, %324, %325 : vector<16x16xi1>, vector<16x16xf32>
    %327 = arith.addf %322, %326 : vector<16x16xf32>
    %c22 = arith.constant 22 : index
    %328 = memref.load %arg2[%c22] : memref<98xf32, #tpu.memory_space<smem>>
    %cst_101 = arith.constant 0.000000e+00 : f32
    %329 = vector.broadcast %328 : f32 to vector<16x16xf32>
    %330 = vector.broadcast %cst_101 : f32 to vector<16x16xf32>
    %331 = arith.select %67, %329, %330 : vector<16x16xi1>, vector<16x16xf32>
    %332 = arith.addf %327, %331 : vector<16x16xf32>
    %c23 = arith.constant 23 : index
    %333 = memref.load %arg2[%c23] : memref<98xf32, #tpu.memory_space<smem>>
    %cst_102 = arith.constant 0.000000e+00 : f32
    %334 = vector.broadcast %333 : f32 to vector<16x16xf32>
    %335 = vector.broadcast %cst_102 : f32 to vector<16x16xf32>
    %336 = arith.select %70, %334, %335 : vector<16x16xi1>, vector<16x16xf32>
    %337 = arith.addf %332, %336 : vector<16x16xf32>
    %c24 = arith.constant 24 : index
    %338 = memref.load %arg2[%c24] : memref<98xf32, #tpu.memory_space<smem>>
    %cst_103 = arith.constant 0.000000e+00 : f32
    %339 = vector.broadcast %338 : f32 to vector<16x16xf32>
    %340 = vector.broadcast %cst_103 : f32 to vector<16x16xf32>
    %341 = arith.select %73, %339, %340 : vector<16x16xi1>, vector<16x16xf32>
    %342 = arith.addf %337, %341 : vector<16x16xf32>
    %c25 = arith.constant 25 : index
    %343 = memref.load %arg2[%c25] : memref<98xf32, #tpu.memory_space<smem>>
    %cst_104 = arith.constant 0.000000e+00 : f32
    %344 = vector.broadcast %343 : f32 to vector<16x16xf32>
    %345 = vector.broadcast %cst_104 : f32 to vector<16x16xf32>
    %346 = arith.select %76, %344, %345 : vector<16x16xi1>, vector<16x16xf32>
    %347 = arith.addf %342, %346 : vector<16x16xf32>
    %c26 = arith.constant 26 : index
    %348 = memref.load %arg2[%c26] : memref<98xf32, #tpu.memory_space<smem>>
    %cst_105 = arith.constant 0.000000e+00 : f32
    %349 = vector.broadcast %348 : f32 to vector<16x16xf32>
    %350 = vector.broadcast %cst_105 : f32 to vector<16x16xf32>
    %351 = arith.select %79, %349, %350 : vector<16x16xi1>, vector<16x16xf32>
    %352 = arith.addf %347, %351 : vector<16x16xf32>
    %c27 = arith.constant 27 : index
    %353 = memref.load %arg2[%c27] : memref<98xf32, #tpu.memory_space<smem>>
    %cst_106 = arith.constant 0.000000e+00 : f32
    %354 = vector.broadcast %353 : f32 to vector<16x16xf32>
    %355 = vector.broadcast %cst_106 : f32 to vector<16x16xf32>
    %356 = arith.select %82, %354, %355 : vector<16x16xi1>, vector<16x16xf32>
    %357 = arith.addf %352, %356 : vector<16x16xf32>
    %cst_107 = arith.constant dense<0.000000e+00> : vector<16x16xf32>
    %358 = tpu.matmul %15, %357, %cst_107 {dimension_numbers = #tpu.dot_dimension_numbers<[1], [0], [0], [1], [0, 0, 1, 1], [], []>} : vector<16x16xf32>, vector<16x16xf32>, vector<16x16xf32> -> vector<16x16xf32>
    %359 = arith.addf %321, %358 : vector<16x16xf32>
    %cst_108 = arith.constant 0.000000e+00 : f32
    %360 = vector.broadcast %cst_108 : f32 to vector<16x16xf32>
    %c70 = arith.constant 70 : index
    %361 = memref.load %arg2[%c70] : memref<98xf32, #tpu.memory_space<smem>>
    %cst_109 = arith.constant 0.000000e+00 : f32
    %362 = vector.broadcast %361 : f32 to vector<16x16xf32>
    %363 = vector.broadcast %cst_109 : f32 to vector<16x16xf32>
    %364 = arith.select %64, %362, %363 : vector<16x16xi1>, vector<16x16xf32>
    %365 = arith.addf %360, %364 : vector<16x16xf32>
    %c71 = arith.constant 71 : index
    %366 = memref.load %arg2[%c71] : memref<98xf32, #tpu.memory_space<smem>>
    %cst_110 = arith.constant 0.000000e+00 : f32
    %367 = vector.broadcast %366 : f32 to vector<16x16xf32>
    %368 = vector.broadcast %cst_110 : f32 to vector<16x16xf32>
    %369 = arith.select %67, %367, %368 : vector<16x16xi1>, vector<16x16xf32>
    %370 = arith.addf %365, %369 : vector<16x16xf32>
    %c72 = arith.constant 72 : index
    %371 = memref.load %arg2[%c72] : memref<98xf32, #tpu.memory_space<smem>>
    %cst_111 = arith.constant 0.000000e+00 : f32
    %372 = vector.broadcast %371 : f32 to vector<16x16xf32>
    %373 = vector.broadcast %cst_111 : f32 to vector<16x16xf32>
    %374 = arith.select %70, %372, %373 : vector<16x16xi1>, vector<16x16xf32>
    %375 = arith.addf %370, %374 : vector<16x16xf32>
    %c73 = arith.constant 73 : index
    %376 = memref.load %arg2[%c73] : memref<98xf32, #tpu.memory_space<smem>>
    %cst_112 = arith.constant 0.000000e+00 : f32
    %377 = vector.broadcast %376 : f32 to vector<16x16xf32>
    %378 = vector.broadcast %cst_112 : f32 to vector<16x16xf32>
    %379 = arith.select %73, %377, %378 : vector<16x16xi1>, vector<16x16xf32>
    %380 = arith.addf %375, %379 : vector<16x16xf32>
    %c74 = arith.constant 74 : index
    %381 = memref.load %arg2[%c74] : memref<98xf32, #tpu.memory_space<smem>>
    %cst_113 = arith.constant 0.000000e+00 : f32
    %382 = vector.broadcast %381 : f32 to vector<16x16xf32>
    %383 = vector.broadcast %cst_113 : f32 to vector<16x16xf32>
    %384 = arith.select %76, %382, %383 : vector<16x16xi1>, vector<16x16xf32>
    %385 = arith.addf %380, %384 : vector<16x16xf32>
    %c75 = arith.constant 75 : index
    %386 = memref.load %arg2[%c75] : memref<98xf32, #tpu.memory_space<smem>>
    %cst_114 = arith.constant 0.000000e+00 : f32
    %387 = vector.broadcast %386 : f32 to vector<16x16xf32>
    %388 = vector.broadcast %cst_114 : f32 to vector<16x16xf32>
    %389 = arith.select %79, %387, %388 : vector<16x16xi1>, vector<16x16xf32>
    %390 = arith.addf %385, %389 : vector<16x16xf32>
    %c76 = arith.constant 76 : index
    %391 = memref.load %arg2[%c76] : memref<98xf32, #tpu.memory_space<smem>>
    %cst_115 = arith.constant 0.000000e+00 : f32
    %392 = vector.broadcast %391 : f32 to vector<16x16xf32>
    %393 = vector.broadcast %cst_115 : f32 to vector<16x16xf32>
    %394 = arith.select %82, %392, %393 : vector<16x16xi1>, vector<16x16xf32>
    %395 = arith.addf %390, %394 : vector<16x16xf32>
    %cst_116 = arith.constant dense<0.000000e+00> : vector<16x16xf32>
    %396 = tpu.matmul %13, %395, %cst_116 {dimension_numbers = #tpu.dot_dimension_numbers<[1], [0], [0], [1], [0, 0, 1, 1], [], []>} : vector<16x16xf32>, vector<16x16xf32>, vector<16x16xf32> -> vector<16x16xf32>
    %397 = arith.addf %359, %396 : vector<16x16xf32>
    %cst_117 = arith.constant dense<0.000000e+00> : vector<16x16xf32>
    %398 = tpu.matmul %41, %397, %cst_117 {dimension_numbers = #tpu.dot_dimension_numbers<[1], [0], [0], [1], [0, 0, 1, 1], [], []>} : vector<16x16xf32>, vector<16x16xf32>, vector<16x16xf32> -> vector<16x16xf32>
    %399 = arith.addf %320, %398 : vector<16x16xf32>
    %cst_118 = arith.constant 0.000000e+00 : f32
    %400 = vector.broadcast %cst_118 : f32 to vector<16x16xf32>
    %cst_119 = arith.constant 0.000000e+00 : f32
    %401 = vector.broadcast %cst_119 : f32 to vector<16x16xf32>
    %c28 = arith.constant 28 : index
    %402 = memref.load %arg2[%c28] : memref<98xf32, #tpu.memory_space<smem>>
    %cst_120 = arith.constant 0.000000e+00 : f32
    %403 = vector.broadcast %402 : f32 to vector<16x16xf32>
    %404 = vector.broadcast %cst_120 : f32 to vector<16x16xf32>
    %405 = arith.select %64, %403, %404 : vector<16x16xi1>, vector<16x16xf32>
    %406 = arith.addf %401, %405 : vector<16x16xf32>
    %c29 = arith.constant 29 : index
    %407 = memref.load %arg2[%c29] : memref<98xf32, #tpu.memory_space<smem>>
    %cst_121 = arith.constant 0.000000e+00 : f32
    %408 = vector.broadcast %407 : f32 to vector<16x16xf32>
    %409 = vector.broadcast %cst_121 : f32 to vector<16x16xf32>
    %410 = arith.select %67, %408, %409 : vector<16x16xi1>, vector<16x16xf32>
    %411 = arith.addf %406, %410 : vector<16x16xf32>
    %c30 = arith.constant 30 : index
    %412 = memref.load %arg2[%c30] : memref<98xf32, #tpu.memory_space<smem>>
    %cst_122 = arith.constant 0.000000e+00 : f32
    %413 = vector.broadcast %412 : f32 to vector<16x16xf32>
    %414 = vector.broadcast %cst_122 : f32 to vector<16x16xf32>
    %415 = arith.select %70, %413, %414 : vector<16x16xi1>, vector<16x16xf32>
    %416 = arith.addf %411, %415 : vector<16x16xf32>
    %c31 = arith.constant 31 : index
    %417 = memref.load %arg2[%c31] : memref<98xf32, #tpu.memory_space<smem>>
    %cst_123 = arith.constant 0.000000e+00 : f32
    %418 = vector.broadcast %417 : f32 to vector<16x16xf32>
    %419 = vector.broadcast %cst_123 : f32 to vector<16x16xf32>
    %420 = arith.select %73, %418, %419 : vector<16x16xi1>, vector<16x16xf32>
    %421 = arith.addf %416, %420 : vector<16x16xf32>
    %c32 = arith.constant 32 : index
    %422 = memref.load %arg2[%c32] : memref<98xf32, #tpu.memory_space<smem>>
    %cst_124 = arith.constant 0.000000e+00 : f32
    %423 = vector.broadcast %422 : f32 to vector<16x16xf32>
    %424 = vector.broadcast %cst_124 : f32 to vector<16x16xf32>
    %425 = arith.select %76, %423, %424 : vector<16x16xi1>, vector<16x16xf32>
    %426 = arith.addf %421, %425 : vector<16x16xf32>
    %c33 = arith.constant 33 : index
    %427 = memref.load %arg2[%c33] : memref<98xf32, #tpu.memory_space<smem>>
    %cst_125 = arith.constant 0.000000e+00 : f32
    %428 = vector.broadcast %427 : f32 to vector<16x16xf32>
    %429 = vector.broadcast %cst_125 : f32 to vector<16x16xf32>
    %430 = arith.select %79, %428, %429 : vector<16x16xi1>, vector<16x16xf32>
    %431 = arith.addf %426, %430 : vector<16x16xf32>
    %c34 = arith.constant 34 : index
    %432 = memref.load %arg2[%c34] : memref<98xf32, #tpu.memory_space<smem>>
    %cst_126 = arith.constant 0.000000e+00 : f32
    %433 = vector.broadcast %432 : f32 to vector<16x16xf32>
    %434 = vector.broadcast %cst_126 : f32 to vector<16x16xf32>
    %435 = arith.select %82, %433, %434 : vector<16x16xi1>, vector<16x16xf32>
    %436 = arith.addf %431, %435 : vector<16x16xf32>
    %cst_127 = arith.constant dense<0.000000e+00> : vector<16x16xf32>
    %437 = tpu.matmul %15, %436, %cst_127 {dimension_numbers = #tpu.dot_dimension_numbers<[1], [0], [0], [1], [0, 0, 1, 1], [], []>} : vector<16x16xf32>, vector<16x16xf32>, vector<16x16xf32> -> vector<16x16xf32>
    %438 = arith.addf %400, %437 : vector<16x16xf32>
    %cst_128 = arith.constant 0.000000e+00 : f32
    %439 = vector.broadcast %cst_128 : f32 to vector<16x16xf32>
    %c77 = arith.constant 77 : index
    %440 = memref.load %arg2[%c77] : memref<98xf32, #tpu.memory_space<smem>>
    %cst_129 = arith.constant 0.000000e+00 : f32
    %441 = vector.broadcast %440 : f32 to vector<16x16xf32>
    %442 = vector.broadcast %cst_129 : f32 to vector<16x16xf32>
    %443 = arith.select %64, %441, %442 : vector<16x16xi1>, vector<16x16xf32>
    %444 = arith.addf %439, %443 : vector<16x16xf32>
    %c78 = arith.constant 78 : index
    %445 = memref.load %arg2[%c78] : memref<98xf32, #tpu.memory_space<smem>>
    %cst_130 = arith.constant 0.000000e+00 : f32
    %446 = vector.broadcast %445 : f32 to vector<16x16xf32>
    %447 = vector.broadcast %cst_130 : f32 to vector<16x16xf32>
    %448 = arith.select %67, %446, %447 : vector<16x16xi1>, vector<16x16xf32>
    %449 = arith.addf %444, %448 : vector<16x16xf32>
    %c79 = arith.constant 79 : index
    %450 = memref.load %arg2[%c79] : memref<98xf32, #tpu.memory_space<smem>>
    %cst_131 = arith.constant 0.000000e+00 : f32
    %451 = vector.broadcast %450 : f32 to vector<16x16xf32>
    %452 = vector.broadcast %cst_131 : f32 to vector<16x16xf32>
    %453 = arith.select %70, %451, %452 : vector<16x16xi1>, vector<16x16xf32>
    %454 = arith.addf %449, %453 : vector<16x16xf32>
    %c80 = arith.constant 80 : index
    %455 = memref.load %arg2[%c80] : memref<98xf32, #tpu.memory_space<smem>>
    %cst_132 = arith.constant 0.000000e+00 : f32
    %456 = vector.broadcast %455 : f32 to vector<16x16xf32>
    %457 = vector.broadcast %cst_132 : f32 to vector<16x16xf32>
    %458 = arith.select %73, %456, %457 : vector<16x16xi1>, vector<16x16xf32>
    %459 = arith.addf %454, %458 : vector<16x16xf32>
    %c81 = arith.constant 81 : index
    %460 = memref.load %arg2[%c81] : memref<98xf32, #tpu.memory_space<smem>>
    %cst_133 = arith.constant 0.000000e+00 : f32
    %461 = vector.broadcast %460 : f32 to vector<16x16xf32>
    %462 = vector.broadcast %cst_133 : f32 to vector<16x16xf32>
    %463 = arith.select %76, %461, %462 : vector<16x16xi1>, vector<16x16xf32>
    %464 = arith.addf %459, %463 : vector<16x16xf32>
    %c82 = arith.constant 82 : index
    %465 = memref.load %arg2[%c82] : memref<98xf32, #tpu.memory_space<smem>>
    %cst_134 = arith.constant 0.000000e+00 : f32
    %466 = vector.broadcast %465 : f32 to vector<16x16xf32>
    %467 = vector.broadcast %cst_134 : f32 to vector<16x16xf32>
    %468 = arith.select %79, %466, %467 : vector<16x16xi1>, vector<16x16xf32>
    %469 = arith.addf %464, %468 : vector<16x16xf32>
    %c83 = arith.constant 83 : index
    %470 = memref.load %arg2[%c83] : memref<98xf32, #tpu.memory_space<smem>>
    %cst_135 = arith.constant 0.000000e+00 : f32
    %471 = vector.broadcast %470 : f32 to vector<16x16xf32>
    %472 = vector.broadcast %cst_135 : f32 to vector<16x16xf32>
    %473 = arith.select %82, %471, %472 : vector<16x16xi1>, vector<16x16xf32>
    %474 = arith.addf %469, %473 : vector<16x16xf32>
    %cst_136 = arith.constant dense<0.000000e+00> : vector<16x16xf32>
    %475 = tpu.matmul %13, %474, %cst_136 {dimension_numbers = #tpu.dot_dimension_numbers<[1], [0], [0], [1], [0, 0, 1, 1], [], []>} : vector<16x16xf32>, vector<16x16xf32>, vector<16x16xf32> -> vector<16x16xf32>
    %476 = arith.addf %438, %475 : vector<16x16xf32>
    %cst_137 = arith.constant dense<0.000000e+00> : vector<16x16xf32>
    %477 = tpu.matmul %47, %476, %cst_137 {dimension_numbers = #tpu.dot_dimension_numbers<[1], [0], [0], [1], [0, 0, 1, 1], [], []>} : vector<16x16xf32>, vector<16x16xf32>, vector<16x16xf32> -> vector<16x16xf32>
    %478 = arith.addf %399, %477 : vector<16x16xf32>
    %cst_138 = arith.constant 0.000000e+00 : f32
    %479 = vector.broadcast %cst_138 : f32 to vector<16x16xf32>
    %cst_139 = arith.constant 0.000000e+00 : f32
    %480 = vector.broadcast %cst_139 : f32 to vector<16x16xf32>
    %c35 = arith.constant 35 : index
    %481 = memref.load %arg2[%c35] : memref<98xf32, #tpu.memory_space<smem>>
    %cst_140 = arith.constant 0.000000e+00 : f32
    %482 = vector.broadcast %481 : f32 to vector<16x16xf32>
    %483 = vector.broadcast %cst_140 : f32 to vector<16x16xf32>
    %484 = arith.select %64, %482, %483 : vector<16x16xi1>, vector<16x16xf32>
    %485 = arith.addf %480, %484 : vector<16x16xf32>
    %c36 = arith.constant 36 : index
    %486 = memref.load %arg2[%c36] : memref<98xf32, #tpu.memory_space<smem>>
    %cst_141 = arith.constant 0.000000e+00 : f32
    %487 = vector.broadcast %486 : f32 to vector<16x16xf32>
    %488 = vector.broadcast %cst_141 : f32 to vector<16x16xf32>
    %489 = arith.select %67, %487, %488 : vector<16x16xi1>, vector<16x16xf32>
    %490 = arith.addf %485, %489 : vector<16x16xf32>
    %c37 = arith.constant 37 : index
    %491 = memref.load %arg2[%c37] : memref<98xf32, #tpu.memory_space<smem>>
    %cst_142 = arith.constant 0.000000e+00 : f32
    %492 = vector.broadcast %491 : f32 to vector<16x16xf32>
    %493 = vector.broadcast %cst_142 : f32 to vector<16x16xf32>
    %494 = arith.select %70, %492, %493 : vector<16x16xi1>, vector<16x16xf32>
    %495 = arith.addf %490, %494 : vector<16x16xf32>
    %c38 = arith.constant 38 : index
    %496 = memref.load %arg2[%c38] : memref<98xf32, #tpu.memory_space<smem>>
    %cst_143 = arith.constant 0.000000e+00 : f32
    %497 = vector.broadcast %496 : f32 to vector<16x16xf32>
    %498 = vector.broadcast %cst_143 : f32 to vector<16x16xf32>
    %499 = arith.select %73, %497, %498 : vector<16x16xi1>, vector<16x16xf32>
    %500 = arith.addf %495, %499 : vector<16x16xf32>
    %c39 = arith.constant 39 : index
    %501 = memref.load %arg2[%c39] : memref<98xf32, #tpu.memory_space<smem>>
    %cst_144 = arith.constant 0.000000e+00 : f32
    %502 = vector.broadcast %501 : f32 to vector<16x16xf32>
    %503 = vector.broadcast %cst_144 : f32 to vector<16x16xf32>
    %504 = arith.select %76, %502, %503 : vector<16x16xi1>, vector<16x16xf32>
    %505 = arith.addf %500, %504 : vector<16x16xf32>
    %c40 = arith.constant 40 : index
    %506 = memref.load %arg2[%c40] : memref<98xf32, #tpu.memory_space<smem>>
    %cst_145 = arith.constant 0.000000e+00 : f32
    %507 = vector.broadcast %506 : f32 to vector<16x16xf32>
    %508 = vector.broadcast %cst_145 : f32 to vector<16x16xf32>
    %509 = arith.select %79, %507, %508 : vector<16x16xi1>, vector<16x16xf32>
    %510 = arith.addf %505, %509 : vector<16x16xf32>
    %c41 = arith.constant 41 : index
    %511 = memref.load %arg2[%c41] : memref<98xf32, #tpu.memory_space<smem>>
    %cst_146 = arith.constant 0.000000e+00 : f32
    %512 = vector.broadcast %511 : f32 to vector<16x16xf32>
    %513 = vector.broadcast %cst_146 : f32 to vector<16x16xf32>
    %514 = arith.select %82, %512, %513 : vector<16x16xi1>, vector<16x16xf32>
    %515 = arith.addf %510, %514 : vector<16x16xf32>
    %cst_147 = arith.constant dense<0.000000e+00> : vector<16x16xf32>
    %516 = tpu.matmul %15, %515, %cst_147 {dimension_numbers = #tpu.dot_dimension_numbers<[1], [0], [0], [1], [0, 0, 1, 1], [], []>} : vector<16x16xf32>, vector<16x16xf32>, vector<16x16xf32> -> vector<16x16xf32>
    %517 = arith.addf %479, %516 : vector<16x16xf32>
    %cst_148 = arith.constant 0.000000e+00 : f32
    %518 = vector.broadcast %cst_148 : f32 to vector<16x16xf32>
    %c84 = arith.constant 84 : index
    %519 = memref.load %arg2[%c84] : memref<98xf32, #tpu.memory_space<smem>>
    %cst_149 = arith.constant 0.000000e+00 : f32
    %520 = vector.broadcast %519 : f32 to vector<16x16xf32>
    %521 = vector.broadcast %cst_149 : f32 to vector<16x16xf32>
    %522 = arith.select %64, %520, %521 : vector<16x16xi1>, vector<16x16xf32>
    %523 = arith.addf %518, %522 : vector<16x16xf32>
    %c85 = arith.constant 85 : index
    %524 = memref.load %arg2[%c85] : memref<98xf32, #tpu.memory_space<smem>>
    %cst_150 = arith.constant 0.000000e+00 : f32
    %525 = vector.broadcast %524 : f32 to vector<16x16xf32>
    %526 = vector.broadcast %cst_150 : f32 to vector<16x16xf32>
    %527 = arith.select %67, %525, %526 : vector<16x16xi1>, vector<16x16xf32>
    %528 = arith.addf %523, %527 : vector<16x16xf32>
    %c86 = arith.constant 86 : index
    %529 = memref.load %arg2[%c86] : memref<98xf32, #tpu.memory_space<smem>>
    %cst_151 = arith.constant 0.000000e+00 : f32
    %530 = vector.broadcast %529 : f32 to vector<16x16xf32>
    %531 = vector.broadcast %cst_151 : f32 to vector<16x16xf32>
    %532 = arith.select %70, %530, %531 : vector<16x16xi1>, vector<16x16xf32>
    %533 = arith.addf %528, %532 : vector<16x16xf32>
    %c87 = arith.constant 87 : index
    %534 = memref.load %arg2[%c87] : memref<98xf32, #tpu.memory_space<smem>>
    %cst_152 = arith.constant 0.000000e+00 : f32
    %535 = vector.broadcast %534 : f32 to vector<16x16xf32>
    %536 = vector.broadcast %cst_152 : f32 to vector<16x16xf32>
    %537 = arith.select %73, %535, %536 : vector<16x16xi1>, vector<16x16xf32>
    %538 = arith.addf %533, %537 : vector<16x16xf32>
    %c88 = arith.constant 88 : index
    %539 = memref.load %arg2[%c88] : memref<98xf32, #tpu.memory_space<smem>>
    %cst_153 = arith.constant 0.000000e+00 : f32
    %540 = vector.broadcast %539 : f32 to vector<16x16xf32>
    %541 = vector.broadcast %cst_153 : f32 to vector<16x16xf32>
    %542 = arith.select %76, %540, %541 : vector<16x16xi1>, vector<16x16xf32>
    %543 = arith.addf %538, %542 : vector<16x16xf32>
    %c89 = arith.constant 89 : index
    %544 = memref.load %arg2[%c89] : memref<98xf32, #tpu.memory_space<smem>>
    %cst_154 = arith.constant 0.000000e+00 : f32
    %545 = vector.broadcast %544 : f32 to vector<16x16xf32>
    %546 = vector.broadcast %cst_154 : f32 to vector<16x16xf32>
    %547 = arith.select %79, %545, %546 : vector<16x16xi1>, vector<16x16xf32>
    %548 = arith.addf %543, %547 : vector<16x16xf32>
    %c90 = arith.constant 90 : index
    %549 = memref.load %arg2[%c90] : memref<98xf32, #tpu.memory_space<smem>>
    %cst_155 = arith.constant 0.000000e+00 : f32
    %550 = vector.broadcast %549 : f32 to vector<16x16xf32>
    %551 = vector.broadcast %cst_155 : f32 to vector<16x16xf32>
    %552 = arith.select %82, %550, %551 : vector<16x16xi1>, vector<16x16xf32>
    %553 = arith.addf %548, %552 : vector<16x16xf32>
    %cst_156 = arith.constant dense<0.000000e+00> : vector<16x16xf32>
    %554 = tpu.matmul %13, %553, %cst_156 {dimension_numbers = #tpu.dot_dimension_numbers<[1], [0], [0], [1], [0, 0, 1, 1], [], []>} : vector<16x16xf32>, vector<16x16xf32>, vector<16x16xf32> -> vector<16x16xf32>
    %555 = arith.addf %517, %554 : vector<16x16xf32>
    %cst_157 = arith.constant dense<0.000000e+00> : vector<16x16xf32>
    %556 = tpu.matmul %53, %555, %cst_157 {dimension_numbers = #tpu.dot_dimension_numbers<[1], [0], [0], [1], [0, 0, 1, 1], [], []>} : vector<16x16xf32>, vector<16x16xf32>, vector<16x16xf32> -> vector<16x16xf32>
    %557 = arith.addf %478, %556 : vector<16x16xf32>
    %cst_158 = arith.constant 0.000000e+00 : f32
    %558 = vector.broadcast %cst_158 : f32 to vector<16x16xf32>
    %cst_159 = arith.constant 0.000000e+00 : f32
    %559 = vector.broadcast %cst_159 : f32 to vector<16x16xf32>
    %c42 = arith.constant 42 : index
    %560 = memref.load %arg2[%c42] : memref<98xf32, #tpu.memory_space<smem>>
    %cst_160 = arith.constant 0.000000e+00 : f32
    %561 = vector.broadcast %560 : f32 to vector<16x16xf32>
    %562 = vector.broadcast %cst_160 : f32 to vector<16x16xf32>
    %563 = arith.select %64, %561, %562 : vector<16x16xi1>, vector<16x16xf32>
    %564 = arith.addf %559, %563 : vector<16x16xf32>
    %c43 = arith.constant 43 : index
    %565 = memref.load %arg2[%c43] : memref<98xf32, #tpu.memory_space<smem>>
    %cst_161 = arith.constant 0.000000e+00 : f32
    %566 = vector.broadcast %565 : f32 to vector<16x16xf32>
    %567 = vector.broadcast %cst_161 : f32 to vector<16x16xf32>
    %568 = arith.select %67, %566, %567 : vector<16x16xi1>, vector<16x16xf32>
    %569 = arith.addf %564, %568 : vector<16x16xf32>
    %c44 = arith.constant 44 : index
    %570 = memref.load %arg2[%c44] : memref<98xf32, #tpu.memory_space<smem>>
    %cst_162 = arith.constant 0.000000e+00 : f32
    %571 = vector.broadcast %570 : f32 to vector<16x16xf32>
    %572 = vector.broadcast %cst_162 : f32 to vector<16x16xf32>
    %573 = arith.select %70, %571, %572 : vector<16x16xi1>, vector<16x16xf32>
    %574 = arith.addf %569, %573 : vector<16x16xf32>
    %c45 = arith.constant 45 : index
    %575 = memref.load %arg2[%c45] : memref<98xf32, #tpu.memory_space<smem>>
    %cst_163 = arith.constant 0.000000e+00 : f32
    %576 = vector.broadcast %575 : f32 to vector<16x16xf32>
    %577 = vector.broadcast %cst_163 : f32 to vector<16x16xf32>
    %578 = arith.select %73, %576, %577 : vector<16x16xi1>, vector<16x16xf32>
    %579 = arith.addf %574, %578 : vector<16x16xf32>
    %c46 = arith.constant 46 : index
    %580 = memref.load %arg2[%c46] : memref<98xf32, #tpu.memory_space<smem>>
    %cst_164 = arith.constant 0.000000e+00 : f32
    %581 = vector.broadcast %580 : f32 to vector<16x16xf32>
    %582 = vector.broadcast %cst_164 : f32 to vector<16x16xf32>
    %583 = arith.select %76, %581, %582 : vector<16x16xi1>, vector<16x16xf32>
    %584 = arith.addf %579, %583 : vector<16x16xf32>
    %c47 = arith.constant 47 : index
    %585 = memref.load %arg2[%c47] : memref<98xf32, #tpu.memory_space<smem>>
    %cst_165 = arith.constant 0.000000e+00 : f32
    %586 = vector.broadcast %585 : f32 to vector<16x16xf32>
    %587 = vector.broadcast %cst_165 : f32 to vector<16x16xf32>
    %588 = arith.select %79, %586, %587 : vector<16x16xi1>, vector<16x16xf32>
    %589 = arith.addf %584, %588 : vector<16x16xf32>
    %c48 = arith.constant 48 : index
    %590 = memref.load %arg2[%c48] : memref<98xf32, #tpu.memory_space<smem>>
    %cst_166 = arith.constant 0.000000e+00 : f32
    %591 = vector.broadcast %590 : f32 to vector<16x16xf32>
    %592 = vector.broadcast %cst_166 : f32 to vector<16x16xf32>
    %593 = arith.select %82, %591, %592 : vector<16x16xi1>, vector<16x16xf32>
    %594 = arith.addf %589, %593 : vector<16x16xf32>
    %cst_167 = arith.constant dense<0.000000e+00> : vector<16x16xf32>
    %595 = tpu.matmul %15, %594, %cst_167 {dimension_numbers = #tpu.dot_dimension_numbers<[1], [0], [0], [1], [0, 0, 1, 1], [], []>} : vector<16x16xf32>, vector<16x16xf32>, vector<16x16xf32> -> vector<16x16xf32>
    %596 = arith.addf %558, %595 : vector<16x16xf32>
    %cst_168 = arith.constant 0.000000e+00 : f32
    %597 = vector.broadcast %cst_168 : f32 to vector<16x16xf32>
    %c91 = arith.constant 91 : index
    %598 = memref.load %arg2[%c91] : memref<98xf32, #tpu.memory_space<smem>>
    %cst_169 = arith.constant 0.000000e+00 : f32
    %599 = vector.broadcast %598 : f32 to vector<16x16xf32>
    %600 = vector.broadcast %cst_169 : f32 to vector<16x16xf32>
    %601 = arith.select %64, %599, %600 : vector<16x16xi1>, vector<16x16xf32>
    %602 = arith.addf %597, %601 : vector<16x16xf32>
    %c92 = arith.constant 92 : index
    %603 = memref.load %arg2[%c92] : memref<98xf32, #tpu.memory_space<smem>>
    %cst_170 = arith.constant 0.000000e+00 : f32
    %604 = vector.broadcast %603 : f32 to vector<16x16xf32>
    %605 = vector.broadcast %cst_170 : f32 to vector<16x16xf32>
    %606 = arith.select %67, %604, %605 : vector<16x16xi1>, vector<16x16xf32>
    %607 = arith.addf %602, %606 : vector<16x16xf32>
    %c93 = arith.constant 93 : index
    %608 = memref.load %arg2[%c93] : memref<98xf32, #tpu.memory_space<smem>>
    %cst_171 = arith.constant 0.000000e+00 : f32
    %609 = vector.broadcast %608 : f32 to vector<16x16xf32>
    %610 = vector.broadcast %cst_171 : f32 to vector<16x16xf32>
    %611 = arith.select %70, %609, %610 : vector<16x16xi1>, vector<16x16xf32>
    %612 = arith.addf %607, %611 : vector<16x16xf32>
    %c94 = arith.constant 94 : index
    %613 = memref.load %arg2[%c94] : memref<98xf32, #tpu.memory_space<smem>>
    %cst_172 = arith.constant 0.000000e+00 : f32
    %614 = vector.broadcast %613 : f32 to vector<16x16xf32>
    %615 = vector.broadcast %cst_172 : f32 to vector<16x16xf32>
    %616 = arith.select %73, %614, %615 : vector<16x16xi1>, vector<16x16xf32>
    %617 = arith.addf %612, %616 : vector<16x16xf32>
    %c95 = arith.constant 95 : index
    %618 = memref.load %arg2[%c95] : memref<98xf32, #tpu.memory_space<smem>>
    %cst_173 = arith.constant 0.000000e+00 : f32
    %619 = vector.broadcast %618 : f32 to vector<16x16xf32>
    %620 = vector.broadcast %cst_173 : f32 to vector<16x16xf32>
    %621 = arith.select %76, %619, %620 : vector<16x16xi1>, vector<16x16xf32>
    %622 = arith.addf %617, %621 : vector<16x16xf32>
    %c96 = arith.constant 96 : index
    %623 = memref.load %arg2[%c96] : memref<98xf32, #tpu.memory_space<smem>>
    %cst_174 = arith.constant 0.000000e+00 : f32
    %624 = vector.broadcast %623 : f32 to vector<16x16xf32>
    %625 = vector.broadcast %cst_174 : f32 to vector<16x16xf32>
    %626 = arith.select %79, %624, %625 : vector<16x16xi1>, vector<16x16xf32>
    %627 = arith.addf %622, %626 : vector<16x16xf32>
    %c97 = arith.constant 97 : index
    %628 = memref.load %arg2[%c97] : memref<98xf32, #tpu.memory_space<smem>>
    %cst_175 = arith.constant 0.000000e+00 : f32
    %629 = vector.broadcast %628 : f32 to vector<16x16xf32>
    %630 = vector.broadcast %cst_175 : f32 to vector<16x16xf32>
    %631 = arith.select %82, %629, %630 : vector<16x16xi1>, vector<16x16xf32>
    %632 = arith.addf %627, %631 : vector<16x16xf32>
    %cst_176 = arith.constant dense<0.000000e+00> : vector<16x16xf32>
    %633 = tpu.matmul %13, %632, %cst_176 {dimension_numbers = #tpu.dot_dimension_numbers<[1], [0], [0], [1], [0, 0, 1, 1], [], []>} : vector<16x16xf32>, vector<16x16xf32>, vector<16x16xf32> -> vector<16x16xf32>
    %634 = arith.addf %596, %633 : vector<16x16xf32>
    %cst_177 = arith.constant dense<0.000000e+00> : vector<16x16xf32>
    %635 = tpu.matmul %59, %634, %cst_177 {dimension_numbers = #tpu.dot_dimension_numbers<[1], [0], [0], [1], [0, 0, 1, 1], [], []>} : vector<16x16xf32>, vector<16x16xf32>, vector<16x16xf32> -> vector<16x16xf32>
    %636 = arith.addf %557, %635 : vector<16x16xf32>
    %cst_178 = arith.constant 0.000000e+00 : f32
    %637 = vector.broadcast %cst_178 : f32 to vector<16x16xf32>
    %638 = arith.subf %637, %636 : vector<16x16xf32>
    %639 = math.exp %638 : vector<16x16xf32>
    %cst_179 = arith.constant 1.000000e+00 : f32
    %640 = vector.broadcast %cst_179 : f32 to vector<16x16xf32>
    %641 = arith.addf %640, %639 : vector<16x16xf32>
    %cst_180 = arith.constant 1.000000e+00 : f32
    %642 = vector.broadcast %cst_180 : f32 to vector<16x16xf32>
    %643 = arith.divf %642, %641 : vector<16x16xf32>
    %c0_181 = arith.constant 0 : index
    %c0_182 = arith.constant 0 : index
    %c0_183 = arith.constant 0 : index
    %c0_184 = arith.constant 0 : index
    %644 = vector.load %arg3[%c0_181, %c0_182, %c0_183, %c0_184] : memref<1x1x16x16xf32, #tpu.memory_space<vmem>>, vector<1x1x16x16xf32>
    %645 = vector.shape_cast %644 : vector<1x1x16x16xf32> to vector<16x16xf32>
    %646 = vector.shape_cast %643 : vector<16x16xf32> to vector<1x1x16x16xf32>
    tpu.vector_store %arg3[%c0_181, %c0_182, %c0_183, %c0_184], %646 {strides = array<i32>} : memref<1x1x16x16xf32, #tpu.memory_space<vmem>>, vector<1x1x16x16xf32>,
    return
  }
  func.func @transform_0(%arg0: i32) -> (i32, i32, i32, i32) {
    %c0_i32 = arith.constant 0 : i32
    %c0_i32_0 = arith.constant 0 : i32
    %c0_i32_1 = arith.constant 0 : i32
    %c0_i32_2 = arith.constant 0 : i32
    return %arg0, %c0_i32, %c0_i32_0, %c0_i32_1 : i32, i32, i32, i32
  }
  func.func @transform_1(%arg0: i32) -> i32 {
    %c0_i32 = arith.constant 0 : i32
    %c0_i32_0 = arith.constant 0 : i32
    return %c0_i32 : i32
  }
  func.func @transform_2(%arg0: i32) -> (i32, i32, i32, i32) {
    %c0_i32 = arith.constant 0 : i32
    %c0_i32_0 = arith.constant 0 : i32
    %c0_i32_1 = arith.constant 0 : i32
    %c0_i32_2 = arith.constant 0 : i32
    return %arg0, %c0_i32, %c0_i32_0, %c0_i32_1 : i32, i32, i32, i32
  }
}

</mosaic_0001>

<llo_original>
// kernel: tpu_custom_call.1
$region0: #{tpu_custom_call.1}
  #allocation0 [shape = 'u32[]', space=smem, size = 0x4, offset = 0x4, fixed_abs, tag = 'smem constant byte address 0x4 - core index']
  #allocation1 [shape = 'u32[72,128]{1,0:T(1,128)}', space=vmem, size = 0x9000, scoped, tag = 'internal scratch']
  %s0 = inlined_call_operand.hbm [shape: f32[2,4,16,16], index: 0, kind: input, shape index: {}]
  %s1 = inlined_call_operand.hbm [shape: f32[98], index: 1, kind: input, shape index: {}]
  %s2 = inlined_call_operand.hbm [shape: f32[2,1,16,16], index: 2, kind: output, shape index: {}]
  %s3 = sld [smem:[#allocation0]]
  $region49: #{tpu_custom_call.1} parent=0
    _
  %s5 = ssub.s32 1, %s3
  %s6 = scalar_select 0, %s5, %s3
  $region1: #{tpu_custom_call.1} parent=0
    #allocation2 [shape = 'u8[65536]{0}', space=vmem, size = 0x10000, scoped, tag = 'input window, operand 0']
    #allocation3 [shape = 's32[2]{0}', space=sflag, size = 0x8, scoped, tag = 'scoped memory for tpu_custom_call.1']
    #allocation4 [shape = 's32[2]{0}', space=sflag, size = 0x8, scoped, tag = 'scoped memory for tpu_custom_call.1']
    #allocation5 [shape = 's32[2]{0}', space=sflag, size = 0x8, scoped, tag = 'scoped memory for tpu_custom_call.1']
    #allocation6 [shape = 'u8[512]{0}', space=smem, size = 0x200, scoped, tag = 'input window, operand 1, single buffered']
    #allocation7 [shape = 'u8[16384]{0}', space=vmem, size = 0x4000, scoped, tag = 'output window, operand 0']
    %7 = vsyncpa [#allocation3], 0
    %s8 = scalar_lea.sflag [#allocation3], 1
    %9 = vsyncpa %s8, 0
    %10 = vsyncpa [#allocation5], 0
    %11 = vsyncpa [#allocation4], 0
    %s12 = scalar_lea.sflag [#allocation4], 1
    %13 = vsyncpa %s12, 0
    loop: start=0, step=1, limit=4
    $region2: #{tpu_custom_call.1} parent=1 // loop_pre_header
      _
    $region3: #{tpu_custom_call.1} parent=1 // loop_header
      %s15 = sphi 0, %s19
      %p16 = scmp.ge.s32.totalorder %s15, 4
      %s25 = sphi 0, %s27
      %s28 = sphi 0, %s25
      %s29 = sphi 0, %s28
      %s45 = sphi 0, %s29
      %s49 = sphi 0, %s49
      %s51 = sphi 0, %s49
      %s52 = sphi 0, %s51
      %s66 = sphi 0, %s52
      %s72 = sphi 0, %s74
      %s75 = sphi 0, %s72
      %s76 = sphi 0, %s75
      %s92 = sphi 0, %s76
    $region4: #{tpu_custom_call.1} parent=1 // loop_header_branch
      %18 = sbr.rel (%p16) target = $region8
    $region5: #{tpu_custom_call.1} parent=1 // loop_body
      %s20 = ssub.s32 %s15, 1
      %s21 = ssub.s32 %s15, 2
      %s22 = sadd.s32 %s15, 1
      %s23 = ssub.s32 %s15, %s22
      %p24 = scmp.eq.s32.totalorder %s23, 0
      %s26 = sadd.s32 %s25, 1
      %s27 = scalar_select %p24, %s25, %s26
      %p30 = pneg %p24
      %p31 = scmp.eq.s32.totalorder %s15, 1
      %p32 = por %p30, %p31
      %p33 = scmp.ne.s32.totalorder %s25, %s28
      %p34 = scmp.eq.s32.totalorder %s15, 0
      %p35 = por %p33, %p34
      %p36 = scmp.ne.s32.totalorder %s25, %s28
      %p37 = scmp.eq.s32.totalorder %s20, 1
      %p38 = por %p36, %p37
      %p39 = scmp.ne.s32.totalorder %s28, %s29
      %p40 = scmp.eq.s32.totalorder %s20, 0
      %p41 = por %p39, %p40
      %p42 = scmp.ne.s32.totalorder %s28, %s29
      %p43 = scmp.eq.s32.totalorder %s21, 1
      %p44 = por %p42, %p43
      %p46 = scmp.ne.s32.totalorder %s29, %s45
      %p47 = scmp.eq.s32.totalorder %s21, 0
      %p48 = por %p46, %p47
      %s50 = sadd.s32 %s49, 1
      %p53 = scmp.eq.s32.totalorder %s15, 1
      %p54 = scmp.ne.s32.totalorder %s49, %s51
      %p55 = scmp.eq.s32.totalorder %s15, 0
      %p56 = por %p54, %p55
      %p57 = scmp.ne.s32.totalorder %s49, %s51
      %p58 = scmp.eq.s32.totalorder %s20, 1
      %p59 = por %p57, %p58
      %p60 = scmp.ne.s32.totalorder %s51, %s52
      %p61 = scmp.eq.s32.totalorder %s20, 0
      %p62 = por %p60, %p61
      %p63 = scmp.ne.s32.totalorder %s51, %s52
      %p64 = scmp.eq.s32.totalorder %s21, 1
      %p65 = por %p63, %p64
      %p67 = scmp.ne.s32.totalorder %s52, %s66
      %p68 = scmp.eq.s32.totalorder %s21, 0
      %p69 = por %p67, %p68
      %s70 = ssub.s32 %s15, %s22
      %p71 = scmp.eq.s32.totalorder %s70, 0
      %s73 = sadd.s32 %s72, 1
      %s74 = scalar_select %p71, %s72, %s73
      %p77 = pneg %p71
      %p78 = scmp.eq.s32.totalorder %s15, 1
      %p79 = por %p77, %p78
      %p80 = scmp.ne.s32.totalorder %s72, %s75
      %p81 = scmp.eq.s32.totalorder %s15, 0
      %p82 = por %p80, %p81
      %p83 = scmp.ne.s32.totalorder %s72, %s75
      %p84 = scmp.eq.s32.totalorder %s20, 1
      %p85 = por %p83, %p84
      %p86 = scmp.ne.s32.totalorder %s75, %s76
      %p87 = scmp.eq.s32.totalorder %s20, 0
      %p88 = por %p86, %p87
      %p89 = scmp.ne.s32.totalorder %s75, %s76
      %p90 = scmp.eq.s32.totalorder %s21, 1
      %p91 = por %p89, %p90
      %p93 = scmp.ne.s32.totalorder %s76, %s92
      %p94 = scmp.eq.s32.totalorder %s21, 0
      %p95 = por %p93, %p94
      %p96 = scmp.le.s32.totalorder 1, %s15
      %p97 = scmp.lt.s32.totalorder %s15, 3
      %p98 = pnand %p96, %p97
      %p99 = pneg %p98
      // Predicated region
      $region9: #{tpu_custom_call.1} parent=5 // pred_check
        _
      $region10: #{tpu_custom_call.1} parent=5 // pred_check_branch
        %101 = sbr.rel (%p98) target = $region12
      $region11: #{tpu_custom_call.1} parent=5 // pred_region
        %s102 = ssub.s32 %s15, 1
        // Predicated region
        $region13: #{tpu_custom_call.1} parent=11 // pred_check
          %p103 = pneg %p62
        $region14: #{tpu_custom_call.1} parent=11 // pred_check_branch
          %105 = sbr.rel (%p103) target = $region16
        $region15: #{tpu_custom_call.1} parent=11 // pred_region
          %107 = vsyncadd [#allocation5], 0
          %s109 = sshll.u32 %s1, 4
          %s110 = int_to_ptr.hbm [resolvable:$true] %s109
          %112 = dma.hbm_to_smem %s110, 16, [#allocation6], [#allocation5]
        $region16: #{tpu_custom_call.1} parent=11 // pred_fallthru
          _
      $region12: #{tpu_custom_call.1} parent=5 // pred_fallthru
        _
      %p113 = scmp.lt.s32.totalorder %s15, 2
      // Predicated region
      $region17: #{tpu_custom_call.1} parent=5 // pred_check
        %p114 = pneg %p113
      $region18: #{tpu_custom_call.1} parent=5 // pred_check_branch
        %116 = sbr.rel (%p114) target = $region20
      $region19: #{tpu_custom_call.1} parent=5 // pred_region
        // Predicated region
        $region21: #{tpu_custom_call.1} parent=19 // pred_check
          %p117 = pneg %p35
        $region22: #{tpu_custom_call.1} parent=19 // pred_check_branch
          %119 = sbr.rel (%p117) target = $region24
        $region23: #{tpu_custom_call.1} parent=19 // pred_region
          %s120 = sand.u32 %s25, 1
          %s121 = scalar_lea.sflag [#allocation3], %s120
          %s122 = sand.u32 %s25, 1
          %s123 = smul.addr %s122, 64
          %s124 = scalar_lea.vmem [#allocation2], %s123
          %126 = vsyncadd %s121, 0
          %s127 = smul.addr %s15, 8
          %s128 = smul.addr %s127, 8
          %s129 = scalar_lea.hbm %s0, %s128
          %s130 = sshll.u32 %s129, 4
          %s131 = int_to_ptr.hbm [resolvable:$true] %s130
          %s132 = sshll.u32 %s124, 4
          %s133 = int_to_ptr.vmem [resolvable:$true] %s132
          %138 = dma.hbm_to_vmem [thread:$0]  %s131, 1024, %s133, %s121, 128, 128, 8
        $region24: #{tpu_custom_call.1} parent=19 // pred_fallthru
          _
      $region20: #{tpu_custom_call.1} parent=5 // pred_fallthru
        _
      %p139 = scmp.le.s32.totalorder 1, %s15
      %p140 = scmp.lt.s32.totalorder %s15, 3
      %p141 = pnand %p139, %p140
      %p142 = pneg %p141
      // Predicated region
      $region25: #{tpu_custom_call.1} parent=5 // pred_check
        _
      $region26: #{tpu_custom_call.1} parent=5 // pred_check_branch
        %144 = sbr.rel (%p141) target = $region28
      $region27: #{tpu_custom_call.1} parent=5 // pred_region
        %s145 = ssub.s32 %s15, 1
        %s146 = sand.u32 %s28, 1
        %s147 = scalar_lea.sflag [#allocation3], %s146
        %s148 = sand.u32 %s28, 1
        %s149 = smul.addr %s148, 64
        %s150 = scalar_lea.vmem [#allocation2], %s149
        // Predicated region
        $region29: #{tpu_custom_call.1} parent=27 // pred_check
          %p151 = pneg %p41
        $region30: #{tpu_custom_call.1} parent=27 // pred_check_branch
          %153 = sbr.rel (%p151) target = $region32
        $region31: #{tpu_custom_call.1} parent=27 // pred_region
          %155 = dma.done %s147, 1024
        $region32: #{tpu_custom_call.1} parent=27 // pred_fallthru
          _
        // Predicated region
        $region33: #{tpu_custom_call.1} parent=27 // pred_check
          %p156 = pneg %p62
        $region34: #{tpu_custom_call.1} parent=27 // pred_check_branch
          %158 = sbr.rel (%p156) target = $region36
        $region35: #{tpu_custom_call.1} parent=27 // pred_region
          %160 = dma.done [#allocation5], 16
        $region36: #{tpu_custom_call.1} parent=27 // pred_fallthru
          _
        %161 = sfence
        %s162 = sand.u32 %s28, 1
        %s163 = scalar_lea.sflag [#allocation3], %s162
        %s164 = sand.u32 %s28, 1
        %s165 = smul.addr %s164, 64
        %s166 = scalar_lea.vmem [#allocation2], %s165
        %p167 = pneg %p41
        %p168 = pneg %p38
        %p169 = pneg %p62
        %p170 = pneg %p59
        %p171 = pneg %p88
        %p172 = pneg %p85
        %s173 = sand.u32 %s75, 1
        %s174 = scalar_lea.sflag [#allocation4], %s173
        %s175 = sand.u32 %s75, 1
        %s176 = smul.addr %s175, 16
        %s177 = scalar_lea.vmem [#allocation7], %s176
        %v178 = vld [vmem:[%s150] sm:$0xff]
        %v179 = vld [vmem:[%s150 + $0x8] sm:$0xff]
        %s180 = scalar_lea.vmem %s150, 16 [#allocation2]
        %v181 = vld [vmem:[%s180] sm:$0xff]
        %v182 = vld [vmem:[%s180 + $0x8] sm:$0xff]
        %v183 = vadd.f32 %v178, %v181
        %v184 = vadd.f32 %v179, %v182
        %v185 = vmax.f32 %v178, %v181
        %v186 = vmax.f32 %v179, %v182
        %s187 = scalar_lea.vmem %s150, 32 [#allocation2]
        %v188 = vld [vmem:[%s187] sm:$0xff]
        %v189 = vld [vmem:[%s187 + $0x8] sm:$0xff]
        %v190 = vadd.f32 %v183, %v188
        %v191 = vadd.f32 %v184, %v189
        %v192 = vmax.f32 %v185, %v188
        %v193 = vmax.f32 %v186, %v189
        %s194 = scalar_lea.vmem %s150, 48 [#allocation2]
        %v195 = vld [vmem:[%s194] sm:$0xff]
        %v196 = vld [vmem:[%s194 + $0x8] sm:$0xff]
        %v197 = vadd.f32 %v190, %v195
        %v198 = vadd.f32 %v191, %v196
        %v199 = vmax.f32 %v192, %v195
        %v200 = vmax.f32 %v193, %v196
        %v201 = vmul.f32 %v197, 0.25
        %v202 = vmul.f32 %v198, 0.25
        %v203 = vlaneseq
        %v204 = vshrl.u32 %v203, 7
        %v205 = vadd.s32 %v204, 8
        %v206 = vlaneseq
        %v207 = vand.u32 %v206, 127
        %v208 = vadd.s32 %v204, 4294967293
        %v209 = vadd.s32 %v205, 4294967293
        %vm210 = vcmp.eq.s32.totalorder %v207, %v208
        %vm211 = vcmp.eq.s32.totalorder %v207, %v209
        %v212 = vsel %vm210, 1.0, 0.0
        %v213 = vsel %vm211, 1.0, 0.0
        %v214 = vadd.s32 %v204, 4294967294
        %v215 = vadd.s32 %v205, 4294967294
        %vm216 = vcmp.eq.s32.totalorder %v207, %v214
        %vm217 = vcmp.eq.s32.totalorder %v207, %v215
        %v218 = vsel %vm216, 1.0, 0.0
        %v219 = vsel %vm217, 1.0, 0.0
        %v220 = vadd.s32 %v204, 4294967295
        %v221 = vadd.s32 %v205, 4294967295
        %vm222 = vcmp.eq.s32.totalorder %v207, %v220
        %vm223 = vcmp.eq.s32.totalorder %v207, %v221
        %v224 = vsel %vm222, 1.0, 0.0
        %v225 = vsel %vm223, 1.0, 0.0
        %vm226 = vcmp.eq.s32.totalorder %v207, %v204
        %vm227 = vcmp.eq.s32.totalorder %v207, %v205
        %v228 = vsel %vm226, 1.0, 0.0
        %v229 = vsel %vm227, 1.0, 0.0
        %v230 = vadd.s32 %v204, 1
        %v231 = vadd.s32 %v205, 1
        %vm232 = vcmp.eq.s32.totalorder %v207, %v230
        %vm233 = vcmp.eq.s32.totalorder %v207, %v231
        %v234 = vsel %vm232, 1.0, 0.0
        %v235 = vsel %vm233, 1.0, 0.0
        %v236 = vadd.s32 %v204, 2
        %v237 = vadd.s32 %v205, 2
        %vm238 = vcmp.eq.s32.totalorder %v207, %v236
        %vm239 = vcmp.eq.s32.totalorder %v207, %v237
        %v240 = vsel %vm238, 1.0, 0.0
        %v241 = vsel %vm239, 1.0, 0.0
        %v242 = vadd.s32 %v204, 3
        %v243 = vadd.s32 %v205, 3
        %vm244 = vcmp.eq.s32.totalorder %v207, %v242
        %vm245 = vcmp.eq.s32.totalorder %v207, %v243
        %v246 = vsel %vm244, 1.0, 0.0
        %v247 = vsel %vm245, 1.0, 0.0
        %v248 = vsub.s32 %v204, %v207
        %v249 = vsub.s32 %v205, %v207
        %vm250 = vcmp.eq.s32.totalorder %v248, 4294967293
        %vm251 = vcmp.eq.s32.totalorder %v249, 4294967293
        %vm252 = vcmp.eq.s32.totalorder %v248, 4294967294
        %vm253 = vcmp.eq.s32.totalorder %v249, 4294967294
        %vm254 = vcmp.eq.s32.totalorder %v248, 4294967295
        %vm255 = vcmp.eq.s32.totalorder %v249, 4294967295
        %vm256 = vcmp.eq.s32.totalorder %v248, 0
        %vm257 = vcmp.eq.s32.totalorder %v249, 0
        %vm258 = vcmp.eq.s32.totalorder %v248, 1
        %vm259 = vcmp.eq.s32.totalorder %v249, 1
        %vm260 = vcmp.eq.s32.totalorder %v248, 2
        %vm261 = vcmp.eq.s32.totalorder %v249, 2
        %vm262 = vcmp.eq.s32.totalorder %v248, 3
        %vm263 = vcmp.eq.s32.totalorder %v249, 3
        %s264 = sld [smem:[#allocation6]]
        %v265 = vstv %s264
        %v266 = vsel %vm250, %v265, 0.0
        %v267 = vsel %vm251, %v265, 0.0
        %v268 = vadd.f32 %v266, 0.0
        %v269 = vadd.f32 %v267, 0.0
        %s270 = sld [smem:[#allocation6 + $0x1]]
        %v271 = vstv %s270
        %v272 = vsel %vm252, %v271, 0.0
        %v273 = vsel %vm253, %v271, 0.0
        %v274 = vadd.f32 %v268, %v272
        %v275 = vadd.f32 %v269, %v273
        %s276 = sld [smem:[#allocation6 + $0x2]]
        %v277 = vstv %s276
        %v278 = vsel %vm254, %v277, 0.0
        %v279 = vsel %vm255, %v277, 0.0
        %v280 = vadd.f32 %v274, %v278
        %v281 = vadd.f32 %v275, %v279
        %s282 = sld [smem:[#allocation6 + $0x3]]
        %v283 = vstv %s282
        %v284 = vsel %vm256, %v283, 0.0
        %v285 = vsel %vm257, %v283, 0.0
        %v286 = vadd.f32 %v280, %v284
        %v287 = vadd.f32 %v281, %v285
        %s288 = sld [smem:[#allocation6 + $0x4]]
        %v289 = vstv %s288
        %v290 = vsel %vm258, %v289, 0.0
        %v291 = vsel %vm259, %v289, 0.0
        %v292 = vadd.f32 %v286, %v290
        %v293 = vadd.f32 %v287, %v291
        %s294 = sld [smem:[#allocation6 + $0x5]]
        %v295 = vstv %s294
        %v296 = vsel %vm260, %v295, 0.0
        %v297 = vsel %vm261, %v295, 0.0
        %v298 = vadd.f32 %v292, %v296
        %v299 = vadd.f32 %v293, %v297
        %s300 = sld [smem:[#allocation6 + $0x6]]
        %v301 = vstv %s300
        %v302 = vsel %vm262, %v301, 0.0
        %v303 = vsel %vm263, %v301, 0.0
        %v304 = vadd.f32 %v298, %v302
        %v305 = vadd.f32 %v299, %v303
        %s306 = sld [smem:[#allocation6 + $0x31]]
        %v307 = vstv %s306
        %v308 = vsel %vm250, %v307, 0.0
        %v309 = vsel %vm251, %v307, 0.0
        %v310 = vadd.f32 %v308, 0.0
        %v311 = vadd.f32 %v309, 0.0
        %s312 = sld [smem:[#allocation6 + $0x32]]
        %v313 = vstv %s312
        %v314 = vsel %vm252, %v313, 0.0
        %v315 = vsel %vm253, %v313, 0.0
        %v316 = vadd.f32 %v310, %v314
        %v317 = vadd.f32 %v311, %v315
        %s318 = sld [smem:[#allocation6 + $0x33]]
        %v319 = vstv %s318
        %v320 = vsel %vm254, %v319, 0.0
        %v321 = vsel %vm255, %v319, 0.0
        %v322 = vadd.f32 %v316, %v320
        %v323 = vadd.f32 %v317, %v321
        %s324 = sld [smem:[#allocation6 + $0x34]]
        %v325 = vstv %s324
        %v326 = vsel %vm256, %v325, 0.0
        %v327 = vsel %vm257, %v325, 0.0
        %v328 = vadd.f32 %v322, %v326
        %v329 = vadd.f32 %v323, %v327
        %s330 = sld [smem:[#allocation6 + $0x35]]
        %v331 = vstv %s330
        %v332 = vsel %vm258, %v331, 0.0
        %v333 = vsel %vm259, %v331, 0.0
        %v334 = vadd.f32 %v328, %v332
        %v335 = vadd.f32 %v329, %v333
        %s336 = sld [smem:[#allocation6 + $0x36]]
        %v337 = vstv %s336
        %v338 = vsel %vm260, %v337, 0.0
        %v339 = vsel %vm261, %v337, 0.0
        %v340 = vadd.f32 %v334, %v338
        %v341 = vadd.f32 %v335, %v339
        %s342 = sld [smem:[#allocation6 + $0x37]]
        %v343 = vstv %s342
        %v344 = vsel %vm262, %v343, 0.0
        %v345 = vsel %vm263, %v343, 0.0
        %v346 = vadd.f32 %v340, %v344
        %v347 = vadd.f32 %v341, %v345
        %vm348 = vcmask 130048
        %v350 = vsel %vm348, %v199, 0
        %v353 = vsel %vm348, %v200, 0
        %355 = vmatpush.msra.mxu0 0.0
        %356 = vmatpush.msra.mxu0 0.0
        %357 = vmatpush.msra.mxu0 0.0
        %358 = vmatpush.msra.mxu0 0.0
        %359 = vmatpush.msra.mxu0 0.0
        %360 = vmatpush.msra.mxu0 0.0
        %361 = vmatpush.msra.mxu0 0.0
        %362 = vmatpush.msra.mxu0 0.0
        %363 = vmatpush.msra.mxu0 0.0
        %364 = vmatpush.msra.mxu0 0.0
        %365 = vmatpush.msra.mxu0 0.0
        %366 = vmatpush.msra.mxu0 0.0
        %367 = vmatpush.msra.mxu0 0.0
        %368 = vmatpush.msra.mxu0 0.0
        %369 = vmatpush.msra.mxu0 %v347
        %370 = vmatpush.msra.mxu0 %v346
        %371 = vmatmul.f32.gmra.mxu0 %v350
        %v372 = vpop.f32.mrf.mxu0
        %v373 = vadd.f32 0.0, %v372
        %374 = vmatmul.f32.gmra.mxu0 %v353
        %v375 = vpop.f32.mrf.mxu0
        %v376 = vadd.f32 0.0, %v375
        %377 = vdwg.mxu0
        %v379 = vsel %vm348, %v201, 0
        %v382 = vsel %vm348, %v202, 0
        %384 = vmatpush.msra.mxu0 0.0
        %385 = vmatpush.msra.mxu0 0.0
        %386 = vmatpush.msra.mxu0 0.0
        %387 = vmatpush.msra.mxu0 0.0
        %388 = vmatpush.msra.mxu0 0.0
        %389 = vmatpush.msra.mxu0 0.0
        %390 = vmatpush.msra.mxu0 0.0
        %391 = vmatpush.msra.mxu0 0.0
        %392 = vmatpush.msra.mxu0 0.0
        %393 = vmatpush.msra.mxu0 0.0
        %394 = vmatpush.msra.mxu0 0.0
        %395 = vmatpush.msra.mxu0 0.0
        %396 = vmatpush.msra.mxu0 0.0
        %397 = vmatpush.msra.mxu0 0.0
        %398 = vmatpush.msra.mxu0 %v305
        %399 = vmatpush.msra.mxu0 %v304
        %400 = vmatmul.f32.gmra.mxu0 %v379
        %v401 = vpop.f32.mrf.mxu0
        %v402 = vadd.f32 %v373, %v401
        %403 = vmatmul.f32.gmra.mxu0 %v382
        %v404 = vpop.f32.mrf.mxu0
        %v405 = vadd.f32 %v376, %v404
        %406 = vdwg.mxu0
        %s407 = sld [smem:[#allocation6 + $0x7]]
        %v408 = vstv %s407
        %v409 = vsel %vm250, %v408, 0.0
        %v410 = vsel %vm251, %v408, 0.0
        %v411 = vadd.f32 %v409, 0.0
        %v412 = vadd.f32 %v410, 0.0
        %s413 = sld [smem:[#allocation6 + $0x8]]
        %v414 = vstv %s413
        %v415 = vsel %vm252, %v414, 0.0
        %v416 = vsel %vm253, %v414, 0.0
        %v417 = vadd.f32 %v411, %v415
        %v418 = vadd.f32 %v412, %v416
        %s419 = sld [smem:[#allocation6 + $0x9]]
        %v420 = vstv %s419
        %v421 = vsel %vm254, %v420, 0.0
        %v422 = vsel %vm255, %v420, 0.0
        %v423 = vadd.f32 %v417, %v421
        %v424 = vadd.f32 %v418, %v422
        %s425 = sld [smem:[#allocation6 + $0xa]]
        %v426 = vstv %s425
        %v427 = vsel %vm256, %v426, 0.0
        %v428 = vsel %vm257, %v426, 0.0
        %v429 = vadd.f32 %v423, %v427
        %v430 = vadd.f32 %v424, %v428
        %s431 = sld [smem:[#allocation6 + $0xb]]
        %v432 = vstv %s431
        %v433 = vsel %vm258, %v432, 0.0
        %v434 = vsel %vm259, %v432, 0.0
        %v435 = vadd.f32 %v429, %v433
        %v436 = vadd.f32 %v430, %v434
        %s437 = sld [smem:[#allocation6 + $0xc]]
        %v438 = vstv %s437
        %v439 = vsel %vm260, %v438, 0.0
        %v440 = vsel %vm261, %v438, 0.0
        %v441 = vadd.f32 %v435, %v439
        %v442 = vadd.f32 %v436, %v440
        %s443 = sld [smem:[#allocation6 + $0xd]]
        %v444 = vstv %s443
        %v445 = vsel %vm262, %v444, 0.0
        %v446 = vsel %vm263, %v444, 0.0
        %v447 = vadd.f32 %v441, %v445
        %v448 = vadd.f32 %v442, %v446
        %s449 = sld [smem:[#allocation6 + $0x38]]
        %v450 = vstv %s449
        %v451 = vsel %vm250, %v450, 0.0
        %v452 = vsel %vm251, %v450, 0.0
        %v453 = vadd.f32 %v451, 0.0
        %v454 = vadd.f32 %v452, 0.0
        %s455 = sld [smem:[#allocation6 + $0x39]]
        %v456 = vstv %s455
        %v457 = vsel %vm252, %v456, 0.0
        %v458 = vsel %vm253, %v456, 0.0
        %v459 = vadd.f32 %v453, %v457
        %v460 = vadd.f32 %v454, %v458
        %s461 = sld [smem:[#allocation6 + $0x3a]]
        %v462 = vstv %s461
        %v463 = vsel %vm254, %v462, 0.0
        %v464 = vsel %vm255, %v462, 0.0
        %v465 = vadd.f32 %v459, %v463
        %v466 = vadd.f32 %v460, %v464
        %s467 = sld [smem:[#allocation6 + $0x3b]]
        %v468 = vstv %s467
        %v469 = vsel %vm256, %v468, 0.0
        %v470 = vsel %vm257, %v468, 0.0
        %v471 = vadd.f32 %v465, %v469
        %v472 = vadd.f32 %v466, %v470
        %s473 = sld [smem:[#allocation6 + $0x3c]]
        %v474 = vstv %s473
        %v475 = vsel %vm258, %v474, 0.0
        %v476 = vsel %vm259, %v474, 0.0
        %v477 = vadd.f32 %v471, %v475
        %v478 = vadd.f32 %v472, %v476
        %s479 = sld [smem:[#allocation6 + $0x3d]]
        %v480 = vstv %s479
        %v481 = vsel %vm260, %v480, 0.0
        %v482 = vsel %vm261, %v480, 0.0
        %v483 = vadd.f32 %v477, %v481
        %v484 = vadd.f32 %v478, %v482
        %s485 = sld [smem:[#allocation6 + $0x3e]]
        %v486 = vstv %s485
        %v487 = vsel %vm262, %v486, 0.0
        %v488 = vsel %vm263, %v486, 0.0
        %v489 = vadd.f32 %v483, %v487
        %v490 = vadd.f32 %v484, %v488
        %491 = vmatpush.msra.mxu0 0.0
        %492 = vmatpush.msra.mxu0 0.0
        %493 = vmatpush.msra.mxu0 0.0
        %494 = vmatpush.msra.mxu0 0.0
        %495 = vmatpush.msra.mxu0 0.0
        %496 = vmatpush.msra.mxu0 0.0
        %497 = vmatpush.msra.mxu0 0.0
        %498 = vmatpush.msra.mxu0 0.0
        %499 = vmatpush.msra.mxu0 0.0
        %500 = vmatpush.msra.mxu0 0.0
        %501 = vmatpush.msra.mxu0 0.0
        %502 = vmatpush.msra.mxu0 0.0
        %503 = vmatpush.msra.mxu0 0.0
        %504 = vmatpush.msra.mxu0 0.0
        %505 = vmatpush.msra.mxu0 %v490
        %506 = vmatpush.msra.mxu0 %v489
        %507 = vmatmul.f32.gmra.mxu0 %v350
        %v508 = vpop.f32.mrf.mxu0
        %v509 = vadd.f32 0.0, %v508
        %510 = vmatmul.f32.gmra.mxu0 %v353
        %v511 = vpop.f32.mrf.mxu0
        %v512 = vadd.f32 0.0, %v511
        %513 = vdwg.mxu0
        %514 = vmatpush.msra.mxu0 0.0
        %515 = vmatpush.msra.mxu0 0.0
        %516 = vmatpush.msra.mxu0 0.0
        %517 = vmatpush.msra.mxu0 0.0
        %518 = vmatpush.msra.mxu0 0.0
        %519 = vmatpush.msra.mxu0 0.0
        %520 = vmatpush.msra.mxu0 0.0
        %521 = vmatpush.msra.mxu0 0.0
        %522 = vmatpush.msra.mxu0 0.0
        %523 = vmatpush.msra.mxu0 0.0
        %524 = vmatpush.msra.mxu0 0.0
        %525 = vmatpush.msra.mxu0 0.0
        %526 = vmatpush.msra.mxu0 0.0
        %527 = vmatpush.msra.mxu0 0.0
        %528 = vmatpush.msra.mxu0 %v448
        %529 = vmatpush.msra.mxu0 %v447
        %530 = vmatmul.f32.gmra.mxu0 %v379
        %v531 = vpop.f32.mrf.mxu0
        %v532 = vadd.f32 %v509, %v531
        %533 = vmatmul.f32.gmra.mxu0 %v382
        %v534 = vpop.f32.mrf.mxu0
        %v535 = vadd.f32 %v512, %v534
        %536 = vdwg.mxu0
        %v538 = vsel %vm348, %v218, 0
        %v541 = vsel %vm348, %v219, 0
        %543 = vmatpush.msra.mxu0 0.0
        %544 = vmatpush.msra.mxu0 0.0
        %545 = vmatpush.msra.mxu0 0.0
        %546 = vmatpush.msra.mxu0 0.0
        %547 = vmatpush.msra.mxu0 0.0
        %548 = vmatpush.msra.mxu0 0.0
        %549 = vmatpush.msra.mxu0 0.0
        %550 = vmatpush.msra.mxu0 0.0
        %551 = vmatpush.msra.mxu0 0.0
        %552 = vmatpush.msra.mxu0 0.0
        %553 = vmatpush.msra.mxu0 0.0
        %554 = vmatpush.msra.mxu0 0.0
        %555 = vmatpush.msra.mxu0 0.0
        %556 = vmatpush.msra.mxu0 0.0
        %557 = vmatpush.msra.mxu0 %v535
        %558 = vmatpush.msra.mxu0 %v532
        %559 = vmatmul.f32.gmra.mxu0 %v538
        %v560 = vpop.f32.mrf.mxu0
        %v561 = vadd.f32 0.0, %v560
        %562 = vmatmul.f32.gmra.mxu0 %v541
        %v563 = vpop.f32.mrf.mxu0
        %v564 = vadd.f32 0.0, %v563
        %565 = vdwg.mxu0
        %v567 = vsel %vm348, %v212, 0
        %v570 = vsel %vm348, %v213, 0
        %572 = vmatpush.msra.mxu0 0.0
        %573 = vmatpush.msra.mxu0 0.0
        %574 = vmatpush.msra.mxu0 0.0
        %575 = vmatpush.msra.mxu0 0.0
        %576 = vmatpush.msra.mxu0 0.0
        %577 = vmatpush.msra.mxu0 0.0
        %578 = vmatpush.msra.mxu0 0.0
        %579 = vmatpush.msra.mxu0 0.0
        %580 = vmatpush.msra.mxu0 0.0
        %581 = vmatpush.msra.mxu0 0.0
        %582 = vmatpush.msra.mxu0 0.0
        %583 = vmatpush.msra.mxu0 0.0
        %584 = vmatpush.msra.mxu0 0.0
        %585 = vmatpush.msra.mxu0 0.0
        %586 = vmatpush.msra.mxu0 %v405
        %587 = vmatpush.msra.mxu0 %v402
        %588 = vmatmul.f32.gmra.mxu0 %v567
        %v589 = vpop.f32.mrf.mxu0
        %v590 = vadd.f32 %v561, %v589
        %591 = vmatmul.f32.gmra.mxu0 %v570
        %v592 = vpop.f32.mrf.mxu0
        %v593 = vadd.f32 %v564, %v592
        %594 = vdwg.mxu0
        %s595 = sld [smem:[#allocation6 + $0xe]]
        %v596 = vstv %s595
        %v597 = vsel %vm250, %v596, 0.0
        %v598 = vsel %vm251, %v596, 0.0
        %v599 = vadd.f32 %v597, 0.0
        %v600 = vadd.f32 %v598, 0.0
        %s601 = sld [smem:[#allocation6 + $0xf]]
        %v602 = vstv %s601
        %v603 = vsel %vm252, %v602, 0.0
        %v604 = vsel %vm253, %v602, 0.0
        %v605 = vadd.f32 %v599, %v603
        %v606 = vadd.f32 %v600, %v604
        %s607 = sld [smem:[#allocation6 + $0x10]]
        %v608 = vstv %s607
        %v609 = vsel %vm254, %v608, 0.0
        %v610 = vsel %vm255, %v608, 0.0
        %v611 = vadd.f32 %v605, %v609
        %v612 = vadd.f32 %v606, %v610
        %s613 = sld [smem:[#allocation6 + $0x11]]
        %v614 = vstv %s613
        %v615 = vsel %vm256, %v614, 0.0
        %v616 = vsel %vm257, %v614, 0.0
        %v617 = vadd.f32 %v611, %v615
        %v618 = vadd.f32 %v612, %v616
        %s619 = sld [smem:[#allocation6 + $0x12]]
        %v620 = vstv %s619
        %v621 = vsel %vm258, %v620, 0.0
        %v622 = vsel %vm259, %v620, 0.0
        %v623 = vadd.f32 %v617, %v621
        %v624 = vadd.f32 %v618, %v622
        %s625 = sld [smem:[#allocation6 + $0x13]]
        %v626 = vstv %s625
        %v627 = vsel %vm260, %v626, 0.0
        %v628 = vsel %vm261, %v626, 0.0
        %v629 = vadd.f32 %v623, %v627
        %v630 = vadd.f32 %v624, %v628
        %s631 = sld [smem:[#allocation6 + $0x14]]
        %v632 = vstv %s631
        %v633 = vsel %vm262, %v632, 0.0
        %v634 = vsel %vm263, %v632, 0.0
        %v635 = vadd.f32 %v629, %v633
        %v636 = vadd.f32 %v630, %v634
        %s637 = sld [smem:[#allocation6 + $0x3f]]
        %v638 = vstv %s637
        %v639 = vsel %vm250, %v638, 0.0
        %v640 = vsel %vm251, %v638, 0.0
        %v641 = vadd.f32 %v639, 0.0
        %v642 = vadd.f32 %v640, 0.0
        %s643 = sld [smem:[#allocation6 + $0x40]]
        %v644 = vstv %s643
        %v645 = vsel %vm252, %v644, 0.0
        %v646 = vsel %vm253, %v644, 0.0
        %v647 = vadd.f32 %v641, %v645
        %v648 = vadd.f32 %v642, %v646
        %s649 = sld [smem:[#allocation6 + $0x41]]
        %v650 = vstv %s649
        %v651 = vsel %vm254, %v650, 0.0
        %v652 = vsel %vm255, %v650, 0.0
        %v653 = vadd.f32 %v647, %v651
        %v654 = vadd.f32 %v648, %v652
        %s655 = sld [smem:[#allocation6 + $0x42]]
        %v656 = vstv %s655
        %v657 = vsel %vm256, %v656, 0.0
        %v658 = vsel %vm257, %v656, 0.0
        %v659 = vadd.f32 %v653, %v657
        %v660 = vadd.f32 %v654, %v658
        %s661 = sld [smem:[#allocation6 + $0x43]]
        %v662 = vstv %s661
        %v663 = vsel %vm258, %v662, 0.0
        %v664 = vsel %vm259, %v662, 0.0
        %v665 = vadd.f32 %v659, %v663
        %v666 = vadd.f32 %v660, %v664
        %s667 = sld [smem:[#allocation6 + $0x44]]
        %v668 = vstv %s667
        %v669 = vsel %vm260, %v668, 0.0
        %v670 = vsel %vm261, %v668, 0.0
        %v671 = vadd.f32 %v665, %v669
        %v672 = vadd.f32 %v666, %v670
        %s673 = sld [smem:[#allocation6 + $0x45]]
        %v674 = vstv %s673
        %v675 = vsel %vm262, %v674, 0.0
        %v676 = vsel %vm263, %v674, 0.0
        %v677 = vadd.f32 %v671, %v675
        %v678 = vadd.f32 %v672, %v676
        %679 = vmatpush.msra.mxu0 0.0
        %680 = vmatpush.msra.mxu0 0.0
        %681 = vmatpush.msra.mxu0 0.0
        %682 = vmatpush.msra.mxu0 0.0
        %683 = vmatpush.msra.mxu0 0.0
        %684 = vmatpush.msra.mxu0 0.0
        %685 = vmatpush.msra.mxu0 0.0
        %686 = vmatpush.msra.mxu0 0.0
        %687 = vmatpush.msra.mxu0 0.0
        %688 = vmatpush.msra.mxu0 0.0
        %689 = vmatpush.msra.mxu0 0.0
        %690 = vmatpush.msra.mxu0 0.0
        %691 = vmatpush.msra.mxu0 0.0
        %692 = vmatpush.msra.mxu0 0.0
        %693 = vmatpush.msra.mxu0 %v678
        %694 = vmatpush.msra.mxu0 %v677
        %695 = vmatmul.f32.gmra.mxu0 %v350
        %v696 = vpop.f32.mrf.mxu0
        %v697 = vadd.f32 0.0, %v696
        %698 = vmatmul.f32.gmra.mxu0 %v353
        %v699 = vpop.f32.mrf.mxu0
        %v700 = vadd.f32 0.0, %v699
        %701 = vdwg.mxu0
        %702 = vmatpush.msra.mxu0 0.0
        %703 = vmatpush.msra.mxu0 0.0
        %704 = vmatpush.msra.mxu0 0.0
        %705 = vmatpush.msra.mxu0 0.0
        %706 = vmatpush.msra.mxu0 0.0
        %707 = vmatpush.msra.mxu0 0.0
        %708 = vmatpush.msra.mxu0 0.0
        %709 = vmatpush.msra.mxu0 0.0
        %710 = vmatpush.msra.mxu0 0.0
        %711 = vmatpush.msra.mxu0 0.0
        %712 = vmatpush.msra.mxu0 0.0
        %713 = vmatpush.msra.mxu0 0.0
        %714 = vmatpush.msra.mxu0 0.0
        %715 = vmatpush.msra.mxu0 0.0
        %716 = vmatpush.msra.mxu0 %v636
        %717 = vmatpush.msra.mxu0 %v635
        %718 = vmatmul.f32.gmra.mxu0 %v379
        %v719 = vpop.f32.mrf.mxu0
        %v720 = vadd.f32 %v697, %v719
        %721 = vmatmul.f32.gmra.mxu0 %v382
        %v722 = vpop.f32.mrf.mxu0
        %v723 = vadd.f32 %v700, %v722
        %724 = vdwg.mxu0
        %v726 = vsel %vm348, %v224, 0
        %v729 = vsel %vm348, %v225, 0
        %731 = vmatpush.msra.mxu0 0.0
        %732 = vmatpush.msra.mxu0 0.0
        %733 = vmatpush.msra.mxu0 0.0
        %734 = vmatpush.msra.mxu0 0.0
        %735 = vmatpush.msra.mxu0 0.0
        %736 = vmatpush.msra.mxu0 0.0
        %737 = vmatpush.msra.mxu0 0.0
        %738 = vmatpush.msra.mxu0 0.0
        %739 = vmatpush.msra.mxu0 0.0
        %740 = vmatpush.msra.mxu0 0.0
        %741 = vmatpush.msra.mxu0 0.0
        %742 = vmatpush.msra.mxu0 0.0
        %743 = vmatpush.msra.mxu0 0.0
        %744 = vmatpush.msra.mxu0 0.0
        %745 = vmatpush.msra.mxu0 %v723
        %746 = vmatpush.msra.mxu0 %v720
        %747 = vmatmul.f32.gmra.mxu0 %v726
        %v748 = vpop.f32.mrf.mxu0
        %v749 = vadd.f32 0.0, %v748
        %750 = vmatmul.f32.gmra.mxu0 %v729
        %v751 = vpop.f32.mrf.mxu0
        %v752 = vadd.f32 0.0, %v751
        %753 = vdwg.mxu0
        %v754 = vadd.f32 %v590, %v749
        %v755 = vadd.f32 %v593, %v752
        %s756 = sld [smem:[#allocation6 + $0x15]]
        %v757 = vstv %s756
        %v758 = vsel %vm250, %v757, 0.0
        %v759 = vsel %vm251, %v757, 0.0
        %v760 = vadd.f32 %v758, 0.0
        %v761 = vadd.f32 %v759, 0.0
        %s762 = sld [smem:[#allocation6 + $0x16]]
        %v763 = vstv %s762
        %v764 = vsel %vm252, %v763, 0.0
        %v765 = vsel %vm253, %v763, 0.0
        %v766 = vadd.f32 %v760, %v764
        %v767 = vadd.f32 %v761, %v765
        %s768 = sld [smem:[#allocation6 + $0x17]]
        %v769 = vstv %s768
        %v770 = vsel %vm254, %v769, 0.0
        %v771 = vsel %vm255, %v769, 0.0
        %v772 = vadd.f32 %v766, %v770
        %v773 = vadd.f32 %v767, %v771
        %s774 = sld [smem:[#allocation6 + $0x18]]
        %v775 = vstv %s774
        %v776 = vsel %vm256, %v775, 0.0
        %v777 = vsel %vm257, %v775, 0.0
        %v778 = vadd.f32 %v772, %v776
        %v779 = vadd.f32 %v773, %v777
        %s780 = sld [smem:[#allocation6 + $0x19]]
        %v781 = vstv %s780
        %v782 = vsel %vm258, %v781, 0.0
        %v783 = vsel %vm259, %v781, 0.0
        %v784 = vadd.f32 %v778, %v782
        %v785 = vadd.f32 %v779, %v783
        %s786 = sld [smem:[#allocation6 + $0x1a]]
        %v787 = vstv %s786
        %v788 = vsel %vm260, %v787, 0.0
        %v789 = vsel %vm261, %v787, 0.0
        %v790 = vadd.f32 %v784, %v788
        %v791 = vadd.f32 %v785, %v789
        %s792 = sld [smem:[#allocation6 + $0x1b]]
        %v793 = vstv %s792
        %v794 = vsel %vm262, %v793, 0.0
        %v795 = vsel %vm263, %v793, 0.0
        %v796 = vadd.f32 %v790, %v794
        %v797 = vadd.f32 %v791, %v795
        %s798 = sld [smem:[#allocation6 + $0x46]]
        %v799 = vstv %s798
        %v800 = vsel %vm250, %v799, 0.0
        %v801 = vsel %vm251, %v799, 0.0
        %v802 = vadd.f32 %v800, 0.0
        %v803 = vadd.f32 %v801, 0.0
        %s804 = sld [smem:[#allocation6 + $0x47]]
        %v805 = vstv %s804
        %v806 = vsel %vm252, %v805, 0.0
        %v807 = vsel %vm253, %v805, 0.0
        %v808 = vadd.f32 %v802, %v806
        %v809 = vadd.f32 %v803, %v807
        %s810 = sld [smem:[#allocation6 + $0x48]]
        %v811 = vstv %s810
        %v812 = vsel %vm254, %v811, 0.0
        %v813 = vsel %vm255, %v811, 0.0
        %v814 = vadd.f32 %v808, %v812
        %v815 = vadd.f32 %v809, %v813
        %s816 = sld [smem:[#allocation6 + $0x49]]
        %v817 = vstv %s816
        %v818 = vsel %vm256, %v817, 0.0
        %v819 = vsel %vm257, %v817, 0.0
        %v820 = vadd.f32 %v814, %v818
        %v821 = vadd.f32 %v815, %v819
        %s822 = sld [smem:[#allocation6 + $0x4a]]
        %v823 = vstv %s822
        %v824 = vsel %vm258, %v823, 0.0
        %v825 = vsel %vm259, %v823, 0.0
        %v826 = vadd.f32 %v820, %v824
        %v827 = vadd.f32 %v821, %v825
        %s828 = sld [smem:[#allocation6 + $0x4b]]
        %v829 = vstv %s828
        %v830 = vsel %vm260, %v829, 0.0
        %v831 = vsel %vm261, %v829, 0.0
        %v832 = vadd.f32 %v826, %v830
        %v833 = vadd.f32 %v827, %v831
        %s834 = sld [smem:[#allocation6 + $0x4c]]
        %v835 = vstv %s834
        %v836 = vsel %vm262, %v835, 0.0
        %v837 = vsel %vm263, %v835, 0.0
        %v838 = vadd.f32 %v832, %v836
        %v839 = vadd.f32 %v833, %v837
        %840 = vmatpush.msra.mxu0 0.0
        %841 = vmatpush.msra.mxu0 0.0
        %842 = vmatpush.msra.mxu0 0.0
        %843 = vmatpush.msra.mxu0 0.0
        %844 = vmatpush.msra.mxu0 0.0
        %845 = vmatpush.msra.mxu0 0.0
        %846 = vmatpush.msra.mxu0 0.0
        %847 = vmatpush.msra.mxu0 0.0
        %848 = vmatpush.msra.mxu0 0.0
        %849 = vmatpush.msra.mxu0 0.0
        %850 = vmatpush.msra.mxu0 0.0
        %851 = vmatpush.msra.mxu0 0.0
        %852 = vmatpush.msra.mxu0 0.0
        %853 = vmatpush.msra.mxu0 0.0
        %854 = vmatpush.msra.mxu0 %v839
        %855 = vmatpush.msra.mxu0 %v838
        %856 = vmatmul.f32.gmra.mxu0 %v350
        %v857 = vpop.f32.mrf.mxu0
        %v858 = vadd.f32 0.0, %v857
        %859 = vmatmul.f32.gmra.mxu0 %v353
        %v860 = vpop.f32.mrf.mxu0
        %v861 = vadd.f32 0.0, %v860
        %862 = vdwg.mxu0
        %863 = vmatpush.msra.mxu0 0.0
        %864 = vmatpush.msra.mxu0 0.0
        %865 = vmatpush.msra.mxu0 0.0
        %866 = vmatpush.msra.mxu0 0.0
        %867 = vmatpush.msra.mxu0 0.0
        %868 = vmatpush.msra.mxu0 0.0
        %869 = vmatpush.msra.mxu0 0.0
        %870 = vmatpush.msra.mxu0 0.0
        %871 = vmatpush.msra.mxu0 0.0
        %872 = vmatpush.msra.mxu0 0.0
        %873 = vmatpush.msra.mxu0 0.0
        %874 = vmatpush.msra.mxu0 0.0
        %875 = vmatpush.msra.mxu0 0.0
        %876 = vmatpush.msra.mxu0 0.0
        %877 = vmatpush.msra.mxu0 %v797
        %878 = vmatpush.msra.mxu0 %v796
        %879 = vmatmul.f32.gmra.mxu0 %v379
        %v880 = vpop.f32.mrf.mxu0
        %v881 = vadd.f32 %v858, %v880
        %882 = vmatmul.f32.gmra.mxu0 %v382
        %v883 = vpop.f32.mrf.mxu0
        %v884 = vadd.f32 %v861, %v883
        %885 = vdwg.mxu0
        %v887 = vsel %vm348, %v228, 0
        %v890 = vsel %vm348, %v229, 0
        %892 = vmatpush.msra.mxu0 0.0
        %893 = vmatpush.msra.mxu0 0.0
        %894 = vmatpush.msra.mxu0 0.0
        %895 = vmatpush.msra.mxu0 0.0
        %896 = vmatpush.msra.mxu0 0.0
        %897 = vmatpush.msra.mxu0 0.0
        %898 = vmatpush.msra.mxu0 0.0
        %899 = vmatpush.msra.mxu0 0.0
        %900 = vmatpush.msra.mxu0 0.0
        %901 = vmatpush.msra.mxu0 0.0
        %902 = vmatpush.msra.mxu0 0.0
        %903 = vmatpush.msra.mxu0 0.0
        %904 = vmatpush.msra.mxu0 0.0
        %905 = vmatpush.msra.mxu0 0.0
        %906 = vmatpush.msra.mxu0 %v884
        %907 = vmatpush.msra.mxu0 %v881
        %908 = vmatmul.f32.gmra.mxu0 %v887
        %v909 = vpop.f32.mrf.mxu0
        %v910 = vadd.f32 0.0, %v909
        %911 = vmatmul.f32.gmra.mxu0 %v890
        %v912 = vpop.f32.mrf.mxu0
        %v913 = vadd.f32 0.0, %v912
        %914 = vdwg.mxu0
        %v915 = vadd.f32 %v754, %v910
        %v916 = vadd.f32 %v755, %v913
        %s917 = sld [smem:[#allocation6 + $0x1c]]
        %v918 = vstv %s917
        %v919 = vsel %vm250, %v918, 0.0
        %v920 = vsel %vm251, %v918, 0.0
        %v921 = vadd.f32 %v919, 0.0
        %v922 = vadd.f32 %v920, 0.0
        %s923 = sld [smem:[#allocation6 + $0x1d]]
        %v924 = vstv %s923
        %v925 = vsel %vm252, %v924, 0.0
        %v926 = vsel %vm253, %v924, 0.0
        %v927 = vadd.f32 %v921, %v925
        %v928 = vadd.f32 %v922, %v926
        %s929 = sld [smem:[#allocation6 + $0x1e]]
        %v930 = vstv %s929
        %v931 = vsel %vm254, %v930, 0.0
        %v932 = vsel %vm255, %v930, 0.0
        %v933 = vadd.f32 %v927, %v931
        %v934 = vadd.f32 %v928, %v932
        %s935 = sld [smem:[#allocation6 + $0x1f]]
        %v936 = vstv %s935
        %v937 = vsel %vm256, %v936, 0.0
        %v938 = vsel %vm257, %v936, 0.0
        %v939 = vadd.f32 %v933, %v937
        %v940 = vadd.f32 %v934, %v938
        %s941 = sld [smem:[#allocation6 + $0x20]]
        %v942 = vstv %s941
        %v943 = vsel %vm258, %v942, 0.0
        %v944 = vsel %vm259, %v942, 0.0
        %v945 = vadd.f32 %v939, %v943
        %v946 = vadd.f32 %v940, %v944
        %s947 = sld [smem:[#allocation6 + $0x21]]
        %v948 = vstv %s947
        %v949 = vsel %vm260, %v948, 0.0
        %v950 = vsel %vm261, %v948, 0.0
        %v951 = vadd.f32 %v945, %v949
        %v952 = vadd.f32 %v946, %v950
        %s953 = sld [smem:[#allocation6 + $0x22]]
        %v954 = vstv %s953
        %v955 = vsel %vm262, %v954, 0.0
        %v956 = vsel %vm263, %v954, 0.0
        %v957 = vadd.f32 %v951, %v955
        %v958 = vadd.f32 %v952, %v956
        %s959 = sld [smem:[#allocation6 + $0x4d]]
        %v960 = vstv %s959
        %v961 = vsel %vm250, %v960, 0.0
        %v962 = vsel %vm251, %v960, 0.0
        %v963 = vadd.f32 %v961, 0.0
        %v964 = vadd.f32 %v962, 0.0
        %s965 = sld [smem:[#allocation6 + $0x4e]]
        %v966 = vstv %s965
        %v967 = vsel %vm252, %v966, 0.0
        %v968 = vsel %vm253, %v966, 0.0
        %v969 = vadd.f32 %v963, %v967
        %v970 = vadd.f32 %v964, %v968
        %s971 = sld [smem:[#allocation6 + $0x4f]]
        %v972 = vstv %s971
        %v973 = vsel %vm254, %v972, 0.0
        %v974 = vsel %vm255, %v972, 0.0
        %v975 = vadd.f32 %v969, %v973
        %v976 = vadd.f32 %v970, %v974
        %s977 = sld [smem:[#allocation6 + $0x50]]
        %v978 = vstv %s977
        %v979 = vsel %vm256, %v978, 0.0
        %v980 = vsel %vm257, %v978, 0.0
        %v981 = vadd.f32 %v975, %v979
        %v982 = vadd.f32 %v976, %v980
        %s983 = sld [smem:[#allocation6 + $0x51]]
        %v984 = vstv %s983
        %v985 = vsel %vm258, %v984, 0.0
        %v986 = vsel %vm259, %v984, 0.0
        %v987 = vadd.f32 %v981, %v985
        %v988 = vadd.f32 %v982, %v986
        %s989 = sld [smem:[#allocation6 + $0x52]]
        %v990 = vstv %s989
        %v991 = vsel %vm260, %v990, 0.0
        %v992 = vsel %vm261, %v990, 0.0
        %v993 = vadd.f32 %v987, %v991
        %v994 = vadd.f32 %v988, %v992
        %s995 = sld [smem:[#allocation6 + $0x53]]
        %v996 = vstv %s995
        %v997 = vsel %vm262, %v996, 0.0
        %v998 = vsel %vm263, %v996, 0.0
        %v999 = vadd.f32 %v993, %v997
        %v1000 = vadd.f32 %v994, %v998
        %1001 = vmatpush.msra.mxu0 0.0
        %1002 = vmatpush.msra.mxu0 0.0
        %1003 = vmatpush.msra.mxu0 0.0
        %1004 = vmatpush.msra.mxu0 0.0
        %1005 = vmatpush.msra.mxu0 0.0
        %1006 = vmatpush.msra.mxu0 0.0
        %1007 = vmatpush.msra.mxu0 0.0
        %1008 = vmatpush.msra.mxu0 0.0
        %1009 = vmatpush.msra.mxu0 0.0
        %1010 = vmatpush.msra.mxu0 0.0
        %1011 = vmatpush.msra.mxu0 0.0
        %1012 = vmatpush.msra.mxu0 0.0
        %1013 = vmatpush.msra.mxu0 0.0
        %1014 = vmatpush.msra.mxu0 0.0
        %1015 = vmatpush.msra.mxu0 %v1000
        %1016 = vmatpush.msra.mxu0 %v999
        %1017 = vmatmul.f32.gmra.mxu0 %v350
        %v1018 = vpop.f32.mrf.mxu0
        %v1019 = vadd.f32 0.0, %v1018
        %1020 = vmatmul.f32.gmra.mxu0 %v353
        %v1021 = vpop.f32.mrf.mxu0
        %v1022 = vadd.f32 0.0, %v1021
        %1023 = vdwg.mxu0
        %1024 = vmatpush.msra.mxu0 0.0
        %1025 = vmatpush.msra.mxu0 0.0
        %1026 = vmatpush.msra.mxu0 0.0
        %1027 = vmatpush.msra.mxu0 0.0
        %1028 = vmatpush.msra.mxu0 0.0
        %1029 = vmatpush.msra.mxu0 0.0
        %1030 = vmatpush.msra.mxu0 0.0
        %1031 = vmatpush.msra.mxu0 0.0
        %1032 = vmatpush.msra.mxu0 0.0
        %1033 = vmatpush.msra.mxu0 0.0
        %1034 = vmatpush.msra.mxu0 0.0
        %1035 = vmatpush.msra.mxu0 0.0
        %1036 = vmatpush.msra.mxu0 0.0
        %1037 = vmatpush.msra.mxu0 0.0
        %1038 = vmatpush.msra.mxu0 %v958
        %1039 = vmatpush.msra.mxu0 %v957
        %1040 = vmatmul.f32.gmra.mxu0 %v379
        %v1041 = vpop.f32.mrf.mxu0
        %v1042 = vadd.f32 %v1019, %v1041
        %1043 = vmatmul.f32.gmra.mxu0 %v382
        %v1044 = vpop.f32.mrf.mxu0
        %v1045 = vadd.f32 %v1022, %v1044
        %1046 = vdwg.mxu0
        %v1048 = vsel %vm348, %v234, 0
        %v1051 = vsel %vm348, %v235, 0
        %1053 = vmatpush.msra.mxu0 0.0
        %1054 = vmatpush.msra.mxu0 0.0
        %1055 = vmatpush.msra.mxu0 0.0
        %1056 = vmatpush.msra.mxu0 0.0
        %1057 = vmatpush.msra.mxu0 0.0
        %1058 = vmatpush.msra.mxu0 0.0
        %1059 = vmatpush.msra.mxu0 0.0
        %1060 = vmatpush.msra.mxu0 0.0
        %1061 = vmatpush.msra.mxu0 0.0
        %1062 = vmatpush.msra.mxu0 0.0
        %1063 = vmatpush.msra.mxu0 0.0
        %1064 = vmatpush.msra.mxu0 0.0
        %1065 = vmatpush.msra.mxu0 0.0
        %1066 = vmatpush.msra.mxu0 0.0
        %1067 = vmatpush.msra.mxu0 %v1045
        %1068 = vmatpush.msra.mxu0 %v1042
        %1069 = vmatmul.f32.gmra.mxu0 %v1048
        %v1070 = vpop.f32.mrf.mxu0
        %v1071 = vadd.f32 0.0, %v1070
        %1072 = vmatmul.f32.gmra.mxu0 %v1051
        %v1073 = vpop.f32.mrf.mxu0
        %v1074 = vadd.f32 0.0, %v1073
        %1075 = vdwg.mxu0
        %v1076 = vadd.f32 %v915, %v1071
        %v1077 = vadd.f32 %v916, %v1074
        %s1078 = sld [smem:[#allocation6 + $0x23]]
        %v1079 = vstv %s1078
        %v1080 = vsel %vm250, %v1079, 0.0
        %v1081 = vsel %vm251, %v1079, 0.0
        %v1082 = vadd.f32 %v1080, 0.0
        %v1083 = vadd.f32 %v1081, 0.0
        %s1084 = sld [smem:[#allocation6 + $0x24]]
        %v1085 = vstv %s1084
        %v1086 = vsel %vm252, %v1085, 0.0
        %v1087 = vsel %vm253, %v1085, 0.0
        %v1088 = vadd.f32 %v1082, %v1086
        %v1089 = vadd.f32 %v1083, %v1087
        %s1090 = sld [smem:[#allocation6 + $0x25]]
        %v1091 = vstv %s1090
        %v1092 = vsel %vm254, %v1091, 0.0
        %v1093 = vsel %vm255, %v1091, 0.0
        %v1094 = vadd.f32 %v1088, %v1092
        %v1095 = vadd.f32 %v1089, %v1093
        %s1096 = sld [smem:[#allocation6 + $0x26]]
        %v1097 = vstv %s1096
        %v1098 = vsel %vm256, %v1097, 0.0
        %v1099 = vsel %vm257, %v1097, 0.0
        %v1100 = vadd.f32 %v1094, %v1098
        %v1101 = vadd.f32 %v1095, %v1099
        %s1102 = sld [smem:[#allocation6 + $0x27]]
        %v1103 = vstv %s1102
        %v1104 = vsel %vm258, %v1103, 0.0
        %v1105 = vsel %vm259, %v1103, 0.0
        %v1106 = vadd.f32 %v1100, %v1104
        %v1107 = vadd.f32 %v1101, %v1105
        %s1108 = sld [smem:[#allocation6 + $0x28]]
        %v1109 = vstv %s1108
        %v1110 = vsel %vm260, %v1109, 0.0
        %v1111 = vsel %vm261, %v1109, 0.0
        %v1112 = vadd.f32 %v1106, %v1110
        %v1113 = vadd.f32 %v1107, %v1111
        %s1114 = sld [smem:[#allocation6 + $0x29]]
        %v1115 = vstv %s1114
        %v1116 = vsel %vm262, %v1115, 0.0
        %v1117 = vsel %vm263, %v1115, 0.0
        %v1118 = vadd.f32 %v1112, %v1116
        %v1119 = vadd.f32 %v1113, %v1117
        %s1120 = sld [smem:[#allocation6 + $0x54]]
        %v1121 = vstv %s1120
        %v1122 = vsel %vm250, %v1121, 0.0
        %v1123 = vsel %vm251, %v1121, 0.0
        %v1124 = vadd.f32 %v1122, 0.0
        %v1125 = vadd.f32 %v1123, 0.0
        %s1126 = sld [smem:[#allocation6 + $0x55]]
        %v1127 = vstv %s1126
        %v1128 = vsel %vm252, %v1127, 0.0
        %v1129 = vsel %vm253, %v1127, 0.0
        %v1130 = vadd.f32 %v1124, %v1128
        %v1131 = vadd.f32 %v1125, %v1129
        %s1132 = sld [smem:[#allocation6 + $0x56]]
        %v1133 = vstv %s1132
        %v1134 = vsel %vm254, %v1133, 0.0
        %v1135 = vsel %vm255, %v1133, 0.0
        %v1136 = vadd.f32 %v1130, %v1134
        %v1137 = vadd.f32 %v1131, %v1135
        %s1138 = sld [smem:[#allocation6 + $0x57]]
        %v1139 = vstv %s1138
        %v1140 = vsel %vm256, %v1139, 0.0
        %v1141 = vsel %vm257, %v1139, 0.0
        %v1142 = vadd.f32 %v1136, %v1140
        %v1143 = vadd.f32 %v1137, %v1141
        %s1144 = sld [smem:[#allocation6 + $0x58]]
        %v1145 = vstv %s1144
        %v1146 = vsel %vm258, %v1145, 0.0
        %v1147 = vsel %vm259, %v1145, 0.0
        %v1148 = vadd.f32 %v1142, %v1146
        %v1149 = vadd.f32 %v1143, %v1147
        %s1150 = sld [smem:[#allocation6 + $0x59]]
        %v1151 = vstv %s1150
        %v1152 = vsel %vm260, %v1151, 0.0
        %v1153 = vsel %vm261, %v1151, 0.0
        %v1154 = vadd.f32 %v1148, %v1152
        %v1155 = vadd.f32 %v1149, %v1153
        %s1156 = sld [smem:[#allocation6 + $0x5a]]
        %v1157 = vstv %s1156
        %v1158 = vsel %vm262, %v1157, 0.0
        %v1159 = vsel %vm263, %v1157, 0.0
        %v1160 = vadd.f32 %v1154, %v1158
        %v1161 = vadd.f32 %v1155, %v1159
        %1162 = vmatpush.msra.mxu0 0.0
        %1163 = vmatpush.msra.mxu0 0.0
        %1164 = vmatpush.msra.mxu0 0.0
        %1165 = vmatpush.msra.mxu0 0.0
        %1166 = vmatpush.msra.mxu0 0.0
        %1167 = vmatpush.msra.mxu0 0.0
        %1168 = vmatpush.msra.mxu0 0.0
        %1169 = vmatpush.msra.mxu0 0.0
        %1170 = vmatpush.msra.mxu0 0.0
        %1171 = vmatpush.msra.mxu0 0.0
        %1172 = vmatpush.msra.mxu0 0.0
        %1173 = vmatpush.msra.mxu0 0.0
        %1174 = vmatpush.msra.mxu0 0.0
        %1175 = vmatpush.msra.mxu0 0.0
        %1176 = vmatpush.msra.mxu0 %v1161
        %1177 = vmatpush.msra.mxu0 %v1160
        %1178 = vmatmul.f32.gmra.mxu0 %v350
        %v1179 = vpop.f32.mrf.mxu0
        %v1180 = vadd.f32 0.0, %v1179
        %1181 = vmatmul.f32.gmra.mxu0 %v353
        %v1182 = vpop.f32.mrf.mxu0
        %v1183 = vadd.f32 0.0, %v1182
        %1184 = vdwg.mxu0
        %1185 = vmatpush.msra.mxu0 0.0
        %1186 = vmatpush.msra.mxu0 0.0
        %1187 = vmatpush.msra.mxu0 0.0
        %1188 = vmatpush.msra.mxu0 0.0
        %1189 = vmatpush.msra.mxu0 0.0
        %1190 = vmatpush.msra.mxu0 0.0
        %1191 = vmatpush.msra.mxu0 0.0
        %1192 = vmatpush.msra.mxu0 0.0
        %1193 = vmatpush.msra.mxu0 0.0
        %1194 = vmatpush.msra.mxu0 0.0
        %1195 = vmatpush.msra.mxu0 0.0
        %1196 = vmatpush.msra.mxu0 0.0
        %1197 = vmatpush.msra.mxu0 0.0
        %1198 = vmatpush.msra.mxu0 0.0
        %1199 = vmatpush.msra.mxu0 %v1119
        %1200 = vmatpush.msra.mxu0 %v1118
        %1201 = vmatmul.f32.gmra.mxu0 %v379
        %v1202 = vpop.f32.mrf.mxu0
        %v1203 = vadd.f32 %v1180, %v1202
        %1204 = vmatmul.f32.gmra.mxu0 %v382
        %v1205 = vpop.f32.mrf.mxu0
        %v1206 = vadd.f32 %v1183, %v1205
        %1207 = vdwg.mxu0
        %v1209 = vsel %vm348, %v240, 0
        %v1212 = vsel %vm348, %v241, 0
        %1214 = vmatpush.msra.mxu0 0.0
        %1215 = vmatpush.msra.mxu0 0.0
        %1216 = vmatpush.msra.mxu0 0.0
        %1217 = vmatpush.msra.mxu0 0.0
        %1218 = vmatpush.msra.mxu0 0.0
        %1219 = vmatpush.msra.mxu0 0.0
        %1220 = vmatpush.msra.mxu0 0.0
        %1221 = vmatpush.msra.mxu0 0.0
        %1222 = vmatpush.msra.mxu0 0.0
        %1223 = vmatpush.msra.mxu0 0.0
        %1224 = vmatpush.msra.mxu0 0.0
        %1225 = vmatpush.msra.mxu0 0.0
        %1226 = vmatpush.msra.mxu0 0.0
        %1227 = vmatpush.msra.mxu0 0.0
        %1228 = vmatpush.msra.mxu0 %v1206
        %1229 = vmatpush.msra.mxu0 %v1203
        %1230 = vmatmul.f32.gmra.mxu0 %v1209
        %v1231 = vpop.f32.mrf.mxu0
        %v1232 = vadd.f32 0.0, %v1231
        %1233 = vmatmul.f32.gmra.mxu0 %v1212
        %v1234 = vpop.f32.mrf.mxu0
        %v1235 = vadd.f32 0.0, %v1234
        %1236 = vdwg.mxu0
        %v1237 = vadd.f32 %v1076, %v1232
        %v1238 = vadd.f32 %v1077, %v1235
        %s1239 = sld [smem:[#allocation6 + $0x2a]]
        %v1240 = vstv %s1239
        %v1241 = vsel %vm250, %v1240, 0.0
        %v1242 = vsel %vm251, %v1240, 0.0
        %v1243 = vadd.f32 %v1241, 0.0
        %v1244 = vadd.f32 %v1242, 0.0
        %s1245 = sld [smem:[#allocation6 + $0x2b]]
        %v1246 = vstv %s1245
        %v1247 = vsel %vm252, %v1246, 0.0
        %v1248 = vsel %vm253, %v1246, 0.0
        %v1249 = vadd.f32 %v1243, %v1247
        %v1250 = vadd.f32 %v1244, %v1248
        %s1251 = sld [smem:[#allocation6 + $0x2c]]
        %v1252 = vstv %s1251
        %v1253 = vsel %vm254, %v1252, 0.0
        %v1254 = vsel %vm255, %v1252, 0.0
        %v1255 = vadd.f32 %v1249, %v1253
        %v1256 = vadd.f32 %v1250, %v1254
        %s1257 = sld [smem:[#allocation6 + $0x2d]]
        %v1258 = vstv %s1257
        %v1259 = vsel %vm256, %v1258, 0.0
        %v1260 = vsel %vm257, %v1258, 0.0
        %v1261 = vadd.f32 %v1255, %v1259
        %v1262 = vadd.f32 %v1256, %v1260
        %s1263 = sld [smem:[#allocation6 + $0x2e]]
        %v1264 = vstv %s1263
        %v1265 = vsel %vm258, %v1264, 0.0
        %v1266 = vsel %vm259, %v1264, 0.0
        %v1267 = vadd.f32 %v1261, %v1265
        %v1268 = vadd.f32 %v1262, %v1266
        %s1269 = sld [smem:[#allocation6 + $0x2f]]
        %v1270 = vstv %s1269
        %v1271 = vsel %vm260, %v1270, 0.0
        %v1272 = vsel %vm261, %v1270, 0.0
        %v1273 = vadd.f32 %v1267, %v1271
        %v1274 = vadd.f32 %v1268, %v1272
        %s1275 = sld [smem:[#allocation6 + $0x30]]
        %v1276 = vstv %s1275
        %v1277 = vsel %vm262, %v1276, 0.0
        %v1278 = vsel %vm263, %v1276, 0.0
        %v1279 = vadd.f32 %v1273, %v1277
        %v1280 = vadd.f32 %v1274, %v1278
        %s1281 = sld [smem:[#allocation6 + $0x5b]]
        %v1282 = vstv %s1281
        %v1283 = vsel %vm250, %v1282, 0.0
        %v1284 = vsel %vm251, %v1282, 0.0
        %v1285 = vadd.f32 %v1283, 0.0
        %v1286 = vadd.f32 %v1284, 0.0
        %s1287 = sld [smem:[#allocation6 + $0x5c]]
        %v1288 = vstv %s1287
        %v1289 = vsel %vm252, %v1288, 0.0
        %v1290 = vsel %vm253, %v1288, 0.0
        %v1291 = vadd.f32 %v1285, %v1289
        %v1292 = vadd.f32 %v1286, %v1290
        %s1293 = sld [smem:[#allocation6 + $0x5d]]
        %v1294 = vstv %s1293
        %v1295 = vsel %vm254, %v1294, 0.0
        %v1296 = vsel %vm255, %v1294, 0.0
        %v1297 = vadd.f32 %v1291, %v1295
        %v1298 = vadd.f32 %v1292, %v1296
        %s1299 = sld [smem:[#allocation6 + $0x5e]]
        %v1300 = vstv %s1299
        %v1301 = vsel %vm256, %v1300, 0.0
        %v1302 = vsel %vm257, %v1300, 0.0
        %v1303 = vadd.f32 %v1297, %v1301
        %v1304 = vadd.f32 %v1298, %v1302
        %s1305 = sld [smem:[#allocation6 + $0x5f]]
        %v1306 = vstv %s1305
        %v1307 = vsel %vm258, %v1306, 0.0
        %v1308 = vsel %vm259, %v1306, 0.0
        %v1309 = vadd.f32 %v1303, %v1307
        %v1310 = vadd.f32 %v1304, %v1308
        %s1311 = sld [smem:[#allocation6 + $0x60]]
        %v1312 = vstv %s1311
        %v1313 = vsel %vm260, %v1312, 0.0
        %v1314 = vsel %vm261, %v1312, 0.0
        %v1315 = vadd.f32 %v1309, %v1313
        %v1316 = vadd.f32 %v1310, %v1314
        %s1317 = sld [smem:[#allocation6 + $0x61]]
        %v1318 = vstv %s1317
        %v1319 = vsel %vm262, %v1318, 0.0
        %v1320 = vsel %vm263, %v1318, 0.0
        %v1321 = vadd.f32 %v1315, %v1319
        %v1322 = vadd.f32 %v1316, %v1320
        %1323 = vmatpush.msra.mxu0 0.0
        %1324 = vmatpush.msra.mxu0 0.0
        %1325 = vmatpush.msra.mxu0 0.0
        %1326 = vmatpush.msra.mxu0 0.0
        %1327 = vmatpush.msra.mxu0 0.0
        %1328 = vmatpush.msra.mxu0 0.0
        %1329 = vmatpush.msra.mxu0 0.0
        %1330 = vmatpush.msra.mxu0 0.0
        %1331 = vmatpush.msra.mxu0 0.0
        %1332 = vmatpush.msra.mxu0 0.0
        %1333 = vmatpush.msra.mxu0 0.0
        %1334 = vmatpush.msra.mxu0 0.0
        %1335 = vmatpush.msra.mxu0 0.0
        %1336 = vmatpush.msra.mxu0 0.0
        %1337 = vmatpush.msra.mxu0 %v1322
        %1338 = vmatpush.msra.mxu0 %v1321
        %1339 = vmatmul.f32.gmra.mxu0 %v350
        %v1340 = vpop.f32.mrf.mxu0
        %v1341 = vadd.f32 0.0, %v1340
        %1342 = vmatmul.f32.gmra.mxu0 %v353
        %v1343 = vpop.f32.mrf.mxu0
        %v1344 = vadd.f32 0.0, %v1343
        %1345 = vdwg.mxu0
        %1346 = vmatpush.msra.mxu0 0.0
        %1347 = vmatpush.msra.mxu0 0.0
        %1348 = vmatpush.msra.mxu0 0.0
        %1349 = vmatpush.msra.mxu0 0.0
        %1350 = vmatpush.msra.mxu0 0.0
        %1351 = vmatpush.msra.mxu0 0.0
        %1352 = vmatpush.msra.mxu0 0.0
        %1353 = vmatpush.msra.mxu0 0.0
        %1354 = vmatpush.msra.mxu0 0.0
        %1355 = vmatpush.msra.mxu0 0.0
        %1356 = vmatpush.msra.mxu0 0.0
        %1357 = vmatpush.msra.mxu0 0.0
        %1358 = vmatpush.msra.mxu0 0.0
        %1359 = vmatpush.msra.mxu0 0.0
        %1360 = vmatpush.msra.mxu0 %v1280
        %1361 = vmatpush.msra.mxu0 %v1279
        %1362 = vmatmul.f32.gmra.mxu0 %v379
        %v1363 = vpop.f32.mrf.mxu0
        %v1364 = vadd.f32 %v1341, %v1363
        %1365 = vmatmul.f32.gmra.mxu0 %v382
        %v1366 = vpop.f32.mrf.mxu0
        %v1367 = vadd.f32 %v1344, %v1366
        %1368 = vdwg.mxu0
        %v1370 = vsel %vm348, %v246, 0
        %v1373 = vsel %vm348, %v247, 0
        %1375 = vmatpush.msra.mxu0 0.0
        %1376 = vmatpush.msra.mxu0 0.0
        %1377 = vmatpush.msra.mxu0 0.0
        %1378 = vmatpush.msra.mxu0 0.0
        %1379 = vmatpush.msra.mxu0 0.0
        %1380 = vmatpush.msra.mxu0 0.0
        %1381 = vmatpush.msra.mxu0 0.0
        %1382 = vmatpush.msra.mxu0 0.0
        %1383 = vmatpush.msra.mxu0 0.0
        %1384 = vmatpush.msra.mxu0 0.0
        %1385 = vmatpush.msra.mxu0 0.0
        %1386 = vmatpush.msra.mxu0 0.0
        %1387 = vmatpush.msra.mxu0 0.0
        %1388 = vmatpush.msra.mxu0 0.0
        %1389 = vmatpush.msra.mxu0 %v1367
        %1390 = vmatpush.msra.mxu0 %v1364
        %1391 = vmatmul.f32.gmra.mxu0 %v1370
        %v1392 = vpop.f32.mrf.mxu0
        %v1393 = vadd.f32 0.0, %v1392
        %1394 = vmatmul.f32.gmra.mxu0 %v1373
        %v1395 = vpop.f32.mrf.mxu0
        %v1396 = vadd.f32 0.0, %v1395
        %1397 = vdwg.mxu0
        %v1398 = vadd.f32 %v1237, %v1393
        %v1399 = vadd.f32 %v1238, %v1396
        %v1400 = vsub.f32 0.0, %v1398
        %v1401 = vsub.f32 0.0, %v1399
        %v1402 = vmul.f32 %v1400, 1.442695
        %v1403 = vpow.pop %v1402
        %v1404 = vmul.f32 %v1401, 1.442695
        %v1405 = vpow.pop %v1404
        %v1406 = vadd.f32 %v1403, 1.0
        %v1407 = vadd.f32 %v1405, 1.0
        %v1408 = vrcp.pop %v1406
        %v1409 = vmul.f32 %v1406, %v1408
        %v1410 = vsub.f32 1.0, %v1409
        %v1411 = vmul.f32 %v1408, %v1410
        %v1412 = vadd.f32 %v1408, %v1411
        %vm1413 = vweird.f32 %v1406
        %vm1414 = vweird.f32 %v1408
        %vm1415 = vmor %vm1413, %vm1414
        %v1416 = vsel %vm1415, %v1408, %v1412
        %v1417 = vand.u32 2147483647, %v1406
        %vm1418 = vcmp.eq.f32.partialorder %v1417, 8.507059e+37
        %v1419 = vand.u32 %v1406, 2147483648
        %v1420 = vor.u32 1.1754944e-38, %v1419
        %v1421 = vsel %vm1418, %v1420, %v1416
        %v1422 = vmul.f32 1.0, %v1421
        %v1423 = vrcp.pop %v1407
        %v1424 = vmul.f32 %v1407, %v1423
        %v1425 = vsub.f32 1.0, %v1424
        %v1426 = vmul.f32 %v1423, %v1425
        %v1427 = vadd.f32 %v1423, %v1426
        %vm1428 = vweird.f32 %v1407
        %vm1429 = vweird.f32 %v1423
        %vm1430 = vmor %vm1428, %vm1429
        %v1431 = vsel %vm1430, %v1423, %v1427
        %v1432 = vand.u32 2147483647, %v1407
        %vm1433 = vcmp.eq.f32.partialorder %v1432, 8.507059e+37
        %v1434 = vand.u32 %v1407, 2147483648
        %v1435 = vor.u32 1.1754944e-38, %v1434
        %v1436 = vsel %vm1433, %v1435, %v1431
        %v1437 = vmul.f32 1.0, %v1436
        %1438 = vst.msk [vmem:[%s177] sm:$0xff] %vm348, %v1422
        %1439 = vst.msk [vmem:[%s177 + $0x8] sm:$0xff] %vm348, %v1437
        %s1440 = sand.u32 %s75, 1
        %s1441 = scalar_lea.sflag [#allocation4], %s1440
        %s1442 = sand.u32 %s75, 1
        %s1443 = smul.addr %s1442, 16
        %s1444 = scalar_lea.vmem [#allocation7], %s1443
        // Predicated region
        $region37: #{tpu_custom_call.1} parent=27 // pred_check
          %p1445 = pneg %p85
        $region38: #{tpu_custom_call.1} parent=27 // pred_check_branch
          %1447 = sbr.rel (%p1445) target = $region40
        $region39: #{tpu_custom_call.1} parent=27 // pred_region
          %1449 = vsyncadd %s1441, 0
          %s1450 = smul.addr %s20, 2
          %s1451 = smul.addr %s1450, 8
          %s1452 = scalar_lea.hbm %s2, %s1451
          %s1453 = sshll.u32 %s1444, 4
          %s1454 = int_to_ptr.vmem [resolvable:$true] %s1453
          %s1455 = sshll.u32 %s1452, 4
          %s1456 = int_to_ptr.hbm [resolvable:$true] %s1455
          %1461 = dma.vmem_to_hbm [thread:$0]  %s1454, 256, %s1456, %s1441, 128, 128, 8
        $region40: #{tpu_custom_call.1} parent=27 // pred_fallthru
          _
      $region28: #{tpu_custom_call.1} parent=5 // pred_fallthru
        _
      %p1462 = scmp.le.s32.totalorder 2, %s15
      // Predicated region
      $region41: #{tpu_custom_call.1} parent=5 // pred_check
        %p1463 = pneg %p1462
      $region42: #{tpu_custom_call.1} parent=5 // pred_check_branch
        %1465 = sbr.rel (%p1463) target = $region44
      $region43: #{tpu_custom_call.1} parent=5 // pred_region
        %s1466 = ssub.s32 %s15, 2
        // Predicated region
        $region45: #{tpu_custom_call.1} parent=43 // pred_check
          %p1467 = pneg %p91
        $region46: #{tpu_custom_call.1} parent=43 // pred_check_branch
          %1469 = sbr.rel (%p1467) target = $region48
        $region47: #{tpu_custom_call.1} parent=43 // pred_region
          %s1470 = sand.u32 %s76, 1
          %s1471 = scalar_lea.sflag [#allocation4], %s1470
          %s1472 = sand.u32 %s76, 1
          %s1473 = smul.addr %s1472, 16
          %s1474 = scalar_lea.vmem [#allocation7], %s1473
          %1476 = dma.done %s1471, 256
        $region48: #{tpu_custom_call.1} parent=43 // pred_fallthru
          _
      $region44: #{tpu_custom_call.1} parent=5 // pred_fallthru
        _
    $region6: #{tpu_custom_call.1} parent=1 // loop_footer
      %s19 = sadd.s32 1, %s15
    $region7: #{tpu_custom_call.1} parent=1 // loop_footer_branch
      %14 = sbr.rel target = $region3
    $region8: #{tpu_custom_call.1} parent=1 // loop_exit
      _
    %1477 = vsyncpa [#allocation3], 1
    %s1478 = scalar_lea.sflag [#allocation3], 1
    %1479 = vsyncpa %s1478, 1
    %1480 = vsyncpa [#allocation4], 1
    %s1481 = scalar_lea.sflag [#allocation4], 1
    %1482 = vsyncpa %s1481, 1
    %1483 = vsyncpa [#allocation5], 1
    %s1484 = scalar_lea.sflag [#allocation5], 1
    %1485 = vsyncpa %s1484, 1

</llo_original>
